<compile_context>
chip_gen: v7x
topology: tpu7x:2x2x1
jax: 0.10.0
libtpu: 0.0.40
codegen_flags: <defaults>
</compile_context>

<pallas_src>
import jax
import jax.numpy as jnp
from jax import lax
from jax.experimental import pallas as pl
from jax.experimental.pallas import tpu as pltpu

LANE = 128


def _rup(v, m):
    return ((v + m - 1) // m) * m


def _pad2(x, rows, cols):
    return jnp.pad(x, ((0, rows - x.shape[0]), (0, cols - x.shape[1])))


# ----------------------------------------------------------------------------
# Pass 1: degrees for both views (fused with the thin first-layer transform).
#   deg_v = rowsum(A * (1 - p_v)) + 1          (self loop folded into the degree)
#   inv_v = rsqrt(deg_v)
#   u1_on = inv_1 * ((x + perturb_first) @ W1_on)
#   u1_tg = inv_2 * ( x                  @ W1_tg)
# ----------------------------------------------------------------------------
def _deg_u_kernel(a_ref, p1_ref, p2_ref, x_ref, pf_ref, w1o_ref, w1t_ref,
                  inv1_ref, inv2_ref, u1o_ref, u1t_ref,
                  d1_acc, d2_acc):
    j = pl.program_id(1)

    @pl.when(j == 0)
    def _():
        d1_acc[...] = jnp.zeros_like(d1_acc)
        d2_acc[...] = jnp.zeros_like(d2_acc)

    a = a_ref[...].astype(jnp.float32)
    av1 = a * (1.0 - p1_ref[...].astype(jnp.float32))
    av2 = a * (1.0 - p2_ref[...].astype(jnp.float32))
    d1_acc[...] += jnp.sum(av1, axis=1, keepdims=True)
    d2_acc[...] += jnp.sum(av2, axis=1, keepdims=True)

    @pl.when(j == pl.num_programs(1) - 1)
    def _():
        inv1 = lax.rsqrt(jnp.maximum(d1_acc[...] + 1.0, 1e-12))
        inv2 = lax.rsqrt(jnp.maximum(d2_acc[...] + 1.0, 1e-12))
        inv1_ref[...] = inv1
        inv2_ref[...] = inv2
        x = x_ref[...]
        u1o_ref[...] = inv1 * jnp.dot(x + pf_ref[...], w1o_ref[...],
                                      preferred_element_type=jnp.float32)
        u1t_ref[...] = inv2 * jnp.dot(x, w1t_ref[...],
                                      preferred_element_type=jnp.float32)


# ----------------------------------------------------------------------------
# Pass 2: layer-1 propagation for both views, producing the D^-1/2-scaled
# layer-2 inputs.  For each view:
#   h1 = relu(inv * (sum_j Av[i,j] * u1[j] + u1[i]) + b1)      (self loop at j==i)
#   u2 = inv * ((h1 [+ perturb_last]) @ W2)
# ----------------------------------------------------------------------------
def _layer1_kernel(a_ref, p1_ref, p2_ref, u1o_ref, u1t_ref,
                   inv1_ref, inv2_ref, plast_ref,
                   b1o_ref, b1t_ref, w2o_ref, w2t_ref,
                   u2o_ref, u2t_ref,
                   acc_o, acc_t):
    i = pl.program_id(0)
    j = pl.program_id(1)

    @pl.when(j == 0)
    def _():
        acc_o[...] = jnp.zeros_like(acc_o)
        acc_t[...] = jnp.zeros_like(acc_t)

    a = a_ref[...].astype(jnp.float32)
    av1 = (a * (1.0 - p1_ref[...].astype(jnp.float32))).astype(jnp.bfloat16)
    av2 = (a * (1.0 - p2_ref[...].astype(jnp.float32))).astype(jnp.bfloat16)
    u1o = u1o_ref[...]
    u1t = u1t_ref[...]
    acc_o[...] += jnp.dot(av1, u1o.astype(jnp.bfloat16),
                          preferred_element_type=jnp.float32)
    acc_t[...] += jnp.dot(av2, u1t.astype(jnp.bfloat16),
                          preferred_element_type=jnp.float32)

    @pl.when(j == i)   # folded self loop (A_hat = A*(1-p) + I); requires TI == TJ
    def _():
        acc_o[...] += u1o
        acc_t[...] += u1t

    @pl.when(j == pl.num_programs(1) - 1)
    def _():
        inv1 = inv1_ref[...]
        inv2 = inv2_ref[...]
        h1o = jnp.maximum(inv1 * acc_o[...] + b1o_ref[...], 0.0)
        h1t = jnp.maximum(inv2 * acc_t[...] + b1t_ref[...], 0.0)
        # FLAG perturbation on the last-layer input (online branch only).
        u2o_ref[...] = inv1 * jnp.dot(h1o + plast_ref[...], w2o_ref[...],
                                      preferred_element_type=jnp.float32)
        u2t_ref[...] = inv2 * jnp.dot(h1t, w2t_ref[...],
                                      preferred_element_type=jnp.float32)


# ----------------------------------------------------------------------------
# Pass 3: layer-2 propagation for both views + predictor MLP on the online branch.
# ----------------------------------------------------------------------------
def _layer2_pred_kernel(a_ref, p1_ref, p2_ref, u2o_ref, u2t_ref,
                        inv1_ref, inv2_ref,
                        b2o_ref, b2t_ref, pw1_ref, pb1_ref, pw2_ref, pb2_ref,
                        q_ref, ty_ref,
                        acc_o, acc_t):
    i = pl.program_id(0)
    j = pl.program_id(1)

    @pl.when(j == 0)
    def _():
        acc_o[...] = jnp.zeros_like(acc_o)
        acc_t[...] = jnp.zeros_like(acc_t)

    a = a_ref[...].astype(jnp.float32)
    av1 = (a * (1.0 - p1_ref[...].astype(jnp.float32))).astype(jnp.bfloat16)
    av2 = (a * (1.0 - p2_ref[...].astype(jnp.float32))).astype(jnp.bfloat16)
    u2o = u2o_ref[...]
    u2t = u2t_ref[...]
    acc_o[...] += jnp.dot(av1, u2o.astype(jnp.bfloat16),
                          preferred_element_type=jnp.float32)
    acc_t[...] += jnp.dot(av2, u2t.astype(jnp.bfloat16),
                          preferred_element_type=jnp.float32)

    @pl.when(j == i)   # folded self loop
    def _():
        acc_o[...] += u2o
        acc_t[...] += u2t

    @pl.when(j == pl.num_programs(1) - 1)
    def _():
        y_on = inv1_ref[...] * acc_o[...] + b2o_ref[...]
        y_tg = inv2_ref[...] * acc_t[...] + b2t_ref[...]
        ph = jnp.maximum(
            jnp.dot(y_on, pw1_ref[...], preferred_element_type=jnp.float32)
            + pb1_ref[...], 0.0)
        q_ref[...] = (jnp.dot(ph, pw2_ref[...], preferred_element_type=jnp.float32)
                      + pb2_ref[...]).astype(q_ref.dtype)
        ty_ref[...] = y_tg.astype(ty_ref.dtype)


# ----------------------------------------------------------------------------
# Pallas orchestration (inputs already padded / lane-dense / bf16 where needed)
# ----------------------------------------------------------------------------
def _laplace_pallas(a, p1, p2, x, pf, plast, on, pr, tg, *, tile_n):
    n_pad = a.shape[0]
    f_pad = x.shape[1]
    h_pad = on["w1"].shape[1]
    z_pad = on["w2"].shape[1]
    p_pad = pr["w1"].shape[1]
    assert n_pad % tile_n == 0
    grid = (n_pad // tile_n, n_pad // tile_n)

    cparams = pltpu.CompilerParams(
        dimension_semantics=("parallel", "arbitrary"),
        vmem_limit_bytes=32 * 1024 * 1024,
    )
    f32 = jnp.float32

    nn = lambda: pl.BlockSpec((tile_n, tile_n), lambda i, j: (i, j))   # streamed [N,N] tile
    rowb = lambda w: pl.BlockSpec((tile_n, w), lambda i, j: (i, 0))    # per-row-block operand
    colb = lambda w: pl.BlockSpec((tile_n, w), lambda i, j: (j, 0))    # contraction stream
    const = lambda s: pl.BlockSpec(s, lambda i, j: (0, 0))             # VMEM-resident weights

    # ---- pass 1: degrees + scaled first-layer inputs -----------------------
    inv1, inv2, u1o, u1t = pl.pallas_call(
        _deg_u_kernel,
        grid=grid,
        in_specs=[nn(), nn(), nn(),
                  rowb(f_pad), rowb(f_pad),
                  const((f_pad, h_pad)), const((f_pad, h_pad))],
        out_specs=(rowb(1), rowb(1), rowb(h_pad), rowb(h_pad)),
        out_shape=(jax.ShapeDtypeStruct((n_pad, 1), f32),
                   jax.ShapeDtypeStruct((n_pad, 1), f32),
                   jax.ShapeDtypeStruct((n_pad, h_pad), f32),
                   jax.ShapeDtypeStruct((n_pad, h_pad), f32)),
        scratch_shapes=[pltpu.VMEM((tile_n, 1), f32),
                        pltpu.VMEM((tile_n, 1), f32)],
        compiler_params=cparams,
    )(a, p1, p2, x, pf, on["w1"], tg["w1"])

    # ---- pass 2: layer-1 propagation -> scaled layer-2 inputs --------------
    u2o, u2t = pl.pallas_call(
        _layer1_kernel,
        grid=grid,
        in_specs=[nn(), nn(), nn(),
                  colb(h_pad), colb(h_pad),
                  rowb(1), rowb(1),
                  rowb(h_pad),
                  const((1, h_pad)), const((1, h_pad)),
                  const((h_pad, z_pad)), const((h_pad, z_pad))],
        out_specs=(rowb(z_pad), rowb(z_pad)),
        out_shape=(jax.ShapeDtypeStruct((n_pad, z_pad), f32),
                   jax.ShapeDtypeStruct((n_pad, z_pad), f32)),
        scratch_shapes=[pltpu.VMEM((tile_n, h_pad), f32),
                        pltpu.VMEM((tile_n, h_pad), f32)],
        compiler_params=cparams,
    )(a, p1, p2, u1o, u1t, inv1, inv2, plast,
      on["b1"], tg["b1"], on["w2"], tg["w2"])

    # ---- pass 3: layer-2 propagation + predictor MLP ------------------------
    q, ty = pl.pallas_call(
        _layer2_pred_kernel,
        grid=grid,
        in_specs=[nn(), nn(), nn(),
                  colb(z_pad), colb(z_pad),
                  rowb(1), rowb(1),
                  const((1, z_pad)), const((1, z_pad)),
                  const((z_pad, p_pad)), const((1, p_pad)),
                  const((p_pad, z_pad)), const((1, z_pad))],
        out_specs=(rowb(z_pad), rowb(z_pad)),
        out_shape=(jax.ShapeDtypeStruct((n_pad, z_pad), f32),
                   jax.ShapeDtypeStruct((n_pad, z_pad), f32)),
        scratch_shapes=[pltpu.VMEM((tile_n, z_pad), f32),
                        pltpu.VMEM((tile_n, z_pad), f32)],
        compiler_params=cparams,
    )(a, p1, p2, u2o, u2t, inv1, inv2,
      on["b2"], tg["b2"], pr["w1"], pr["b1"], pr["w2"], pr["b2"])

    return q, ty


# ----------------------------------------------------------------------------
# Parameter init (deterministic, synthetic) and forward glue
# ----------------------------------------------------------------------------
def init_mlp2_params(key, in_dim, hid_dim, out_dim):
    k1, k2 = jax.random.split(key)
    s1 = 1.0 / jnp.sqrt(in_dim)
    s2 = 1.0 / jnp.sqrt(hid_dim)
    return {
        "w1": jax.random.uniform(k1, (in_dim, hid_dim), jnp.float32, -s1, s1),
        "b1": jnp.zeros((1, hid_dim), jnp.float32),
        "w2": jax.random.uniform(k2, (hid_dim, out_dim), jnp.float32, -s2, s2),
        "b2": jnp.zeros((1, out_dim), jnp.float32),
    }


def laplace_gnn_node_forward(
    online_params, predictor_params, target_params,
    x, edge_index, ptb_prob1, ptb_prob2,
    perturb_first=None, perturb_last=None, *, tile_n=128,
):
    n, f = x.shape
    h = online_params["w1"].shape[1]
    z = online_params["w2"].shape[1]
    p_hid = predictor_params["w1"].shape[1]

    if perturb_first is None:
        perturb_first = jnp.zeros((n, f), jnp.float32)
    if perturb_last is None:
        perturb_last = jnp.zeros((n, h), jnp.float32)

    # Glue: dense symmetric adjacency from edge_index [2, E].
    a = jnp.zeros((n, n), jnp.float32)
    a = a.at[edge_index[0], edge_index[1]].set(1.0)
    a = jnp.maximum(a, a.T)
    # Enforce the symmetry precondition of the row-sum degree normalization.
    p1 = 0.5 * (ptb_prob1.astype(jnp.float32) + ptb_prob1.astype(jnp.float32).T)
    p2 = 0.5 * (ptb_prob2.astype(jnp.float32) + ptb_prob2.astype(jnp.float32).T)

    # Lane-dense padding: nodes -> multiple of tile_n, feature dims -> multiple of 128.
    n_pad = _rup(n, tile_n)
    f_pad, h_pad = _rup(f, LANE), _rup(h, LANE)
    z_pad, p_pad = _rup(z, LANE), _rup(p_hid, LANE)

    # [N,N] operands go to HBM as bf16 (the kernels are bandwidth-bound on them).
    a_b = _pad2(a, n_pad, n_pad).astype(jnp.bfloat16)
    p1_b = _pad2(p1, n_pad, n_pad).astype(jnp.bfloat16)
    p2_b = _pad2(p2, n_pad, n_pad).astype(jnp.bfloat16)
    x_p = _pad2(x.astype(jnp.float32), n_pad, f_pad)
    pf_p = _pad2(perturb_first.astype(jnp.float32), n_pad, f_pad)
    plast_p = _pad2(perturb_last.astype(jnp.float32), n_pad, h_pad)

    def pad_mlp(p, din, dhid, dout):
        return {"w1": _pad2(p["w1"], din, dhid), "b1": _pad2(p["b1"], 1, dhid),
                "w2": _pad2(p["w2"], dhid, dout), "b2": _pad2(p["b2"], 1, dout)}

    on = pad_mlp(online_params, f_pad, h_pad, z_pad)
    tg = pad_mlp(target_params, f_pad, h_pad, z_pad)
    pr = pad_mlp(predictor_params, z_pad, p_pad, z_pad)

    # TODO(synk): the reference augmentation samples Bernoulli edge flips; we use the
    # expected (soft) perturbation A * (1 - ptb_prob) to stay deterministic.
    q_pad, ty_pad = _laplace_pallas(a_b, p1_b, p2_b, x_p, pf_p, plast_p,
                                    on, pr, tg, tile_n=tile_n)
    online_q = q_pad[:n, :z]
    target_y = lax.stop_gradient(ty_pad[:n, :z])
    return online_q, target_y


# ----------------------------------------------------------------------------
# Main
# ----------------------------------------------------------------------------
if __name__ == "__main__":
    # nodes, in-feat, hidden, embed, predictor-hidden (lane-dense, tile-aligned)
    N, F, H, Z, P = 256, 128, 128, 128, 128

    key = jax.random.PRNGKey(0)
    k_x, k_e, k_p1, k_p2, k_pf, k_plast, k_on, k_pred, k_tgt = jax.random.split(key, 9)

    x = jax.random.normal(k_x, (N, F), jnp.float32)

    # Deterministic graph: ring + a few random chords.
    ring_src = jnp.arange(N, dtype=jnp.int32)
    ring_dst = (ring_src + 1) % N
    extra_src = jax.random.randint(k_e, (64,), 0, N, jnp.int32)
    extra_dst = (extra_src + 7) % N
    edge_index = jnp.stack(
        [jnp.concatenate([ring_src, extra_src]), jnp.concatenate([ring_dst, extra_dst])],
        axis=0,
    )

    # Spectral perturbation probabilities (data.max / data.min surrogates).
    ptb_prob1 = 0.3 * jax.random.uniform(k_p1, (N, N), jnp.float32)
    ptb_prob2 = 0.3 * jax.random.uniform(k_p2, (N, N), jnp.float32)

    # FLAG-style adversarial perturbations fed to the online encoder.
    perturb_first = 0.01 * jax.random.normal(k_pf, (N, F), jnp.float32)
    perturb_last = 0.01 * jax.random.normal(k_plast, (N, H), jnp.float32)

    online_params = init_mlp2_params(k_on, F, H, Z)
    predictor_params = init_mlp2_params(k_pred, Z, P, Z)
    # target_encoder = deepcopy(encoder); target_encoder.reset_parameters()
    # -> independently initialized, frozen parameters.
    target_params = init_mlp2_params(k_tgt, F, H, Z)

    online_q, target_y = laplace_gnn_node_forward(
        online_params, predictor_params, target_params,
        x, edge_index, ptb_prob1, ptb_prob2, perturb_first, perturb_last,
    )
    jax.block_until_ready((online_q, target_y))

    assert online_q.shape == (N, Z) and online_q.dtype == jnp.float32
    assert target_y.shape == (N, Z) and target_y.dtype == jnp.float32
    assert bool(jnp.all(jnp.isfinite(online_q))) and bool(jnp.all(jnp.isfinite(target_y)))
    print("KERNEL_OK")
</pallas_src>

<mosaic_0001>
module attributes {stable_mosaic.version = 11 : i64} {
  func.func @_deg_u_kernel(%arg0: i32, %arg1: i32, %arg2: memref<128x128xbf16, #tpu.memory_space<vmem>>, %arg3: memref<128x128xbf16, #tpu.memory_space<vmem>>, %arg4: memref<128x128xbf16, #tpu.memory_space<vmem>>, %arg5: memref<128x128xf32, #tpu.memory_space<vmem>>, %arg6: memref<128x128xf32, #tpu.memory_space<vmem>>, %arg7: memref<128x128xf32, #tpu.memory_space<vmem>>, %arg8: memref<128x128xf32, #tpu.memory_space<vmem>>, %arg9: memref<128x1xf32, #tpu.memory_space<vmem>>, %arg10: memref<128x1xf32, #tpu.memory_space<vmem>>, %arg11: memref<128x128xf32, #tpu.memory_space<vmem>>, %arg12: memref<128x128xf32, #tpu.memory_space<vmem>>, %arg13: memref<128x1xf32, #tpu.memory_space<vmem>>, %arg14: memref<128x1xf32, #tpu.memory_space<vmem>>) attributes {dimension_semantics = [#tpu.dimension_semantics<parallel>, #tpu.dimension_semantics<arbitrary>], iteration_bounds = array<i64: 2, 2>, scalar_prefetch = 0 : i64, scratch_operands = 2 : i64, tpu.core_type = #tpu.core_type<tc>, window_params = [{transform_indices = @transform_0, window_bounds = array<i64: 128, 128>}, {transform_indices = @transform_1, window_bounds = array<i64: 128, 128>}, {transform_indices = @transform_2, window_bounds = array<i64: 128, 128>}, {transform_indices = @transform_3, window_bounds = array<i64: 128, 128>}, {transform_indices = @transform_4, window_bounds = array<i64: 128, 128>}, {pipeline_mode = #tpu.pipeline_mode<synchronous>, transform_indices = @transform_5, window_bounds = array<i64: 128, 128>}, {pipeline_mode = #tpu.pipeline_mode<synchronous>, transform_indices = @transform_6, window_bounds = array<i64: 128, 128>}, {transform_indices = @transform_7, window_bounds = array<i64: 128, 1>}, {transform_indices = @transform_8, window_bounds = array<i64: 128, 1>}, {transform_indices = @transform_9, window_bounds = array<i64: 128, 128>}, {transform_indices = @transform_10, window_bounds = array<i64: 128, 128>}]} {
    %c0_i32 = arith.constant 0 : i32
    %0 = arith.cmpi eq, %arg1, %c0_i32 : i32
    %1 = arith.extui %0 : i1 to i32
    %c0_i32_0 = arith.constant 0 : i32
    %2 = arith.cmpi ne, %1, %c0_i32_0 : i32
    scf.if %2 {
      %cst_18 = arith.constant 0.000000e+00 : f32
      %28 = vector.broadcast %cst_18 : f32 to vector<128x1xf32>
      %c0_19 = arith.constant 0 : index
      %c0_20 = arith.constant 0 : index
      %29 = vector.load %arg13[%c0_19, %c0_20] : memref<128x1xf32, #tpu.memory_space<vmem>>, vector<128x1xf32>
      tpu.vector_store %arg13[%c0_19, %c0_20], %28 {strides = array<i32>} : memref<128x1xf32, #tpu.memory_space<vmem>>, vector<128x1xf32>,
      %cst_21 = arith.constant 0.000000e+00 : f32
      %30 = vector.broadcast %cst_21 : f32 to vector<128x1xf32>
      %c0_22 = arith.constant 0 : index
      %c0_23 = arith.constant 0 : index
      %31 = vector.load %arg14[%c0_22, %c0_23] : memref<128x1xf32, #tpu.memory_space<vmem>>, vector<128x1xf32>
      tpu.vector_store %arg14[%c0_22, %c0_23], %30 {strides = array<i32>} : memref<128x1xf32, #tpu.memory_space<vmem>>, vector<128x1xf32>,
    } else {
    }
    %c0 = arith.constant 0 : index
    %c0_1 = arith.constant 0 : index
    %3 = vector.load %arg2[%c0, %c0_1] : memref<128x128xbf16, #tpu.memory_space<vmem>>, vector<128x128xbf16>
    %4 = arith.extf %3 : vector<128x128xbf16> to vector<128x128xf32>
    %c0_2 = arith.constant 0 : index
    %c0_3 = arith.constant 0 : index
    %5 = vector.load %arg3[%c0_2, %c0_3] : memref<128x128xbf16, #tpu.memory_space<vmem>>, vector<128x128xbf16>
    %6 = arith.extf %5 : vector<128x128xbf16> to vector<128x128xf32>
    %cst = arith.constant 1.000000e+00 : f32
    %7 = vector.broadcast %cst : f32 to vector<128x128xf32>
    %8 = arith.subf %7, %6 : vector<128x128xf32>
    %9 = arith.mulf %4, %8 : vector<128x128xf32>
    %c0_4 = arith.constant 0 : index
    %c0_5 = arith.constant 0 : index
    %10 = vector.load %arg4[%c0_4, %c0_5] : memref<128x128xbf16, #tpu.memory_space<vmem>>, vector<128x128xbf16>
    %11 = arith.extf %10 : vector<128x128xbf16> to vector<128x128xf32>
    %cst_6 = arith.constant 1.000000e+00 : f32
    %12 = vector.broadcast %cst_6 : f32 to vector<128x128xf32>
    %13 = arith.subf %12, %11 : vector<128x128xf32>
    %14 = arith.mulf %4, %13 : vector<128x128xf32>
    %c0_7 = arith.constant 0 : index
    %c0_8 = arith.constant 0 : index
    %15 = vector.load %arg13[%c0_7, %c0_8] : memref<128x1xf32, #tpu.memory_space<vmem>>, vector<128x1xf32>
    %cst_9 = arith.constant dense<0.000000e+00> : vector<128xf32>
    %16 = vector.multi_reduction <add>, %9, %cst_9 [1] : vector<128x128xf32> to vector<128xf32>
    %17 = vector.shape_cast %16 : vector<128xf32> to vector<128x1xf32>
    %18 = arith.addf %15, %17 : vector<128x1xf32>
    %c0_10 = arith.constant 0 : index
    %c0_11 = arith.constant 0 : index
    %19 = vector.load %arg13[%c0_10, %c0_11] : memref<128x1xf32, #tpu.memory_space<vmem>>, vector<128x1xf32>
    tpu.vector_store %arg13[%c0_10, %c0_11], %18 {strides = array<i32>} : memref<128x1xf32, #tpu.memory_space<vmem>>, vector<128x1xf32>,
    %c0_12 = arith.constant 0 : index
    %c0_13 = arith.constant 0 : index
    %20 = vector.load %arg14[%c0_12, %c0_13] : memref<128x1xf32, #tpu.memory_space<vmem>>, vector<128x1xf32>
    %cst_14 = arith.constant dense<0.000000e+00> : vector<128xf32>
    %21 = vector.multi_reduction <add>, %14, %cst_14 [1] : vector<128x128xf32> to vector<128xf32>
    %22 = vector.shape_cast %21 : vector<128xf32> to vector<128x1xf32>
    %23 = arith.addf %20, %22 : vector<128x1xf32>
    %c0_15 = arith.constant 0 : index
    %c0_16 = arith.constant 0 : index
    %24 = vector.load %arg14[%c0_15, %c0_16] : memref<128x1xf32, #tpu.memory_space<vmem>>, vector<128x1xf32>
    tpu.vector_store %arg14[%c0_15, %c0_16], %23 {strides = array<i32>} : memref<128x1xf32, #tpu.memory_space<vmem>>, vector<128x1xf32>,
    %c1_i32 = arith.constant 1 : i32
    %25 = arith.cmpi eq, %arg1, %c1_i32 : i32
    %26 = arith.extui %25 : i1 to i32
    %c0_i32_17 = arith.constant 0 : i32
    %27 = arith.cmpi ne, %26, %c0_i32_17 : i32
    scf.if %27 {
      %c0_18 = arith.constant 0 : index
      %c0_19 = arith.constant 0 : index
      %28 = vector.load %arg13[%c0_18, %c0_19] : memref<128x1xf32, #tpu.memory_space<vmem>>, vector<128x1xf32>
      %cst_20 = arith.constant 1.000000e+00 : f32
      %29 = vector.broadcast %cst_20 : f32 to vector<128x1xf32>
      %30 = arith.addf %28, %29 : vector<128x1xf32>
      %cst_21 = arith.constant 9.99999996E-13 : f32
      %31 = vector.broadcast %cst_21 : f32 to vector<128x1xf32>
      %32 = arith.maximumf %30, %31 : vector<128x1xf32>
      %33 = math.rsqrt %32 : vector<128x1xf32>
      %c0_22 = arith.constant 0 : index
      %c0_23 = arith.constant 0 : index
      %34 = vector.load %arg14[%c0_22, %c0_23] : memref<128x1xf32, #tpu.memory_space<vmem>>, vector<128x1xf32>
      %cst_24 = arith.constant 1.000000e+00 : f32
      %35 = vector.broadcast %cst_24 : f32 to vector<128x1xf32>
      %36 = arith.addf %34, %35 : vector<128x1xf32>
      %cst_25 = arith.constant 9.99999996E-13 : f32
      %37 = vector.broadcast %cst_25 : f32 to vector<128x1xf32>
      %38 = arith.maximumf %36, %37 : vector<128x1xf32>
      %39 = math.rsqrt %38 : vector<128x1xf32>
      %c0_26 = arith.constant 0 : index
      %c0_27 = arith.constant 0 : index
      %40 = vector.load %arg9[%c0_26, %c0_27] : memref<128x1xf32, #tpu.memory_space<vmem>>, vector<128x1xf32>
      tpu.vector_store %arg9[%c0_26, %c0_27], %33 {strides = array<i32>} : memref<128x1xf32, #tpu.memory_space<vmem>>, vector<128x1xf32>,
      %c0_28 = arith.constant 0 : index
      %c0_29 = arith.constant 0 : index
      %41 = vector.load %arg10[%c0_28, %c0_29] : memref<128x1xf32, #tpu.memory_space<vmem>>, vector<128x1xf32>
      tpu.vector_store %arg10[%c0_28, %c0_29], %39 {strides = array<i32>} : memref<128x1xf32, #tpu.memory_space<vmem>>, vector<128x1xf32>,
      %c0_30 = arith.constant 0 : index
      %c0_31 = arith.constant 0 : index
      %42 = vector.load %arg5[%c0_30, %c0_31] : memref<128x128xf32, #tpu.memory_space<vmem>>, vector<128x128xf32>
      %c0_32 = arith.constant 0 : index
      %c0_33 = arith.constant 0 : index
      %43 = vector.load %arg6[%c0_32, %c0_33] : memref<128x128xf32, #tpu.memory_space<vmem>>, vector<128x128xf32>
      %44 = arith.addf %42, %43 : vector<128x128xf32>
      %c0_34 = arith.constant 0 : index
      %c0_35 = arith.constant 0 : index
      %45 = vector.load %arg7[%c0_34, %c0_35] : memref<128x128xf32, #tpu.memory_space<vmem>>, vector<128x128xf32>
      %cst_36 = arith.constant dense<0.000000e+00> : vector<128x128xf32>
      %46 = tpu.matmul %44, %45, %cst_36 {dimension_numbers = #tpu.dot_dimension_numbers<[1], [0], [0], [1], [0, 0, 1, 1], [], []>} : vector<128x128xf32>, vector<128x128xf32>, vector<128x128xf32> -> vector<128x128xf32>
      %47 = vector.broadcast %33 : vector<128x1xf32> to vector<128x128xf32>
      %48 = arith.mulf %47, %46 : vector<128x128xf32>
      %c0_37 = arith.constant 0 : index
      %c0_38 = arith.constant 0 : index
      %49 = vector.load %arg11[%c0_37, %c0_38] : memref<128x128xf32, #tpu.memory_space<vmem>>, vector<128x128xf32>
      tpu.vector_store %arg11[%c0_37, %c0_38], %48 {strides = array<i32>} : memref<128x128xf32, #tpu.memory_space<vmem>>, vector<128x128xf32>,
      %c0_39 = arith.constant 0 : index
      %c0_40 = arith.constant 0 : index
      %50 = vector.load %arg8[%c0_39, %c0_40] : memref<128x128xf32, #tpu.memory_space<vmem>>, vector<128x128xf32>
      %cst_41 = arith.constant dense<0.000000e+00> : vector<128x128xf32>
      %51 = tpu.matmul %42, %50, %cst_41 {dimension_numbers = #tpu.dot_dimension_numbers<[1], [0], [0], [1], [0, 0, 1, 1], [], []>} : vector<128x128xf32>, vector<128x128xf32>, vector<128x128xf32> -> vector<128x128xf32>
      %52 = vector.broadcast %39 : vector<128x1xf32> to vector<128x128xf32>
      %53 = arith.mulf %52, %51 : vector<128x128xf32>
      %c0_42 = arith.constant 0 : index
      %c0_43 = arith.constant 0 : index
      %54 = vector.load %arg12[%c0_42, %c0_43] : memref<128x128xf32, #tpu.memory_space<vmem>>, vector<128x128xf32>
      tpu.vector_store %arg12[%c0_42, %c0_43], %53 {strides = array<i32>} : memref<128x128xf32, #tpu.memory_space<vmem>>, vector<128x128xf32>,
    } else {
    }
    return
  }
  func.func @transform_0(%arg0: i32, %arg1: i32) -> (i32, i32) {
    %c0_i32 = arith.constant 0 : i32
    return %arg0, %arg1 : i32, i32
  }
  func.func @transform_1(%arg0: i32, %arg1: i32) -> (i32, i32) {
    %c0_i32 = arith.constant 0 : i32
    return %arg0, %arg1 : i32, i32
  }
  func.func @transform_2(%arg0: i32, %arg1: i32) -> (i32, i32) {
    %c0_i32 = arith.constant 0 : i32
    return %arg0, %arg1 : i32, i32
  }
  func.func @transform_3(%arg0: i32, %arg1: i32) -> (i32, i32) {
    %c0_i32 = arith.constant 0 : i32
    %c0_i32_0 = arith.constant 0 : i32
    return %arg0, %c0_i32 : i32, i32
  }
  func.func @transform_4(%arg0: i32, %arg1: i32) -> (i32, i32) {
    %c0_i32 = arith.constant 0 : i32
    %c0_i32_0 = arith.constant 0 : i32
    return %arg0, %c0_i32 : i32, i32
  }
  func.func @transform_5(%arg0: i32, %arg1: i32) -> (i32, i32) {
    %c0_i32 = arith.constant 0 : i32
    %c0_i32_0 = arith.constant 0 : i32
    %c0_i32_1 = arith.constant 0 : i32
    return %c0_i32, %c0_i32_0 : i32, i32
  }
  func.func @transform_6(%arg0: i32, %arg1: i32) -> (i32, i32) {
    %c0_i32 = arith.constant 0 : i32
    %c0_i32_0 = arith.constant 0 : i32
    %c0_i32_1 = arith.constant 0 : i32
    return %c0_i32, %c0_i32_0 : i32, i32
  }
  func.func @transform_7(%arg0: i32, %arg1: i32) -> (i32, i32) {
    %c0_i32 = arith.constant 0 : i32
    %c0_i32_0 = arith.constant 0 : i32
    return %arg0, %c0_i32 : i32, i32
  }
  func.func @transform_8(%arg0: i32, %arg1: i32) -> (i32, i32) {
    %c0_i32 = arith.constant 0 : i32
    %c0_i32_0 = arith.constant 0 : i32
    return %arg0, %c0_i32 : i32, i32
  }
  func.func @transform_9(%arg0: i32, %arg1: i32) -> (i32, i32) {
    %c0_i32 = arith.constant 0 : i32
    %c0_i32_0 = arith.constant 0 : i32
    return %arg0, %c0_i32 : i32, i32
  }
  func.func @transform_10(%arg0: i32, %arg1: i32) -> (i32, i32) {
    %c0_i32 = arith.constant 0 : i32
    %c0_i32_0 = arith.constant 0 : i32
    return %arg0, %c0_i32 : i32, i32
  }
}

</mosaic_0001>

<llo_original>
// kernel: tpu_custom_call.1
$region0: #{tpu_custom_call.1}
  #allocation0 [shape = 'u32[]', space=smem, size = 0x4, offset = 0x4, fixed_abs, tag = 'smem constant byte address 0x4 - core index']
  #allocation1 [shape = 'u32[144,128]{1,0:T(1,128)}', space=vmem, size = 0x12000, scoped, tag = 'internal scratch']
  #allocation2 [shape = 'f32[128,1]{1,0:T(8,128)}', space=vmem, size = 0x10000, scoped, tag = 'scratch operand']
  #allocation3 [shape = 'f32[128,1]{1,0:T(8,128)}', space=vmem, size = 0x10000, scoped, tag = 'scratch operand']
  %s0 = inlined_call_operand.hbm [shape: bf16[256,256], index: 0, kind: input, shape index: {}]
  %s1 = inlined_call_operand.hbm [shape: bf16[256,256], index: 1, kind: input, shape index: {}]
  %s2 = inlined_call_operand.hbm [shape: bf16[256,256], index: 2, kind: input, shape index: {}]
  %s3 = inlined_call_operand.hbm [shape: f32[256,128], index: 3, kind: input, shape index: {}]
  %s4 = inlined_call_operand.hbm [shape: f32[256,128], index: 4, kind: input, shape index: {}]
  %s5 = inlined_call_operand.hbm [shape: f32[128,128], index: 5, kind: input, shape index: {}]
  %s6 = inlined_call_operand.hbm [shape: f32[128,128], index: 6, kind: input, shape index: {}]
  %s7 = inlined_call_operand.vmem [shape: f32[256,1], index: 7, kind: output, shape index: {0}]
  %s8 = inlined_call_operand.vmem [shape: f32[256,1], index: 8, kind: output, shape index: {1}]
  %s9 = inlined_call_operand.hbm [shape: f32[256,128], index: 9, kind: output, shape index: {2}]
  %s10 = inlined_call_operand.hbm [shape: f32[256,128], index: 10, kind: output, shape index: {3}]
  %11 = xla_tuple %s7, %s8, %s9, %s10
  %s12 = sld [smem:[#allocation0]]
  $region121: #{tpu_custom_call.1} parent=0
    _
  %s14 = ssub.s32 1, %s12
  %s15 = scalar_select 0, %s14, %s12
  $region1: #{tpu_custom_call.1} parent=0
    #allocation4 [shape = 'u8[65536]{0}', space=vmem, size = 0x10000, scoped, tag = 'input window, operand 0']
    #allocation5 [shape = 's32[2]{0}', space=sflag, size = 0x8, scoped, tag = 'scoped memory for tpu_custom_call.1']
    #allocation6 [shape = 's32[2]{0}', space=sflag, size = 0x8, scoped, tag = 'scoped memory for tpu_custom_call.1']
    #allocation7 [shape = 'u8[65536]{0}', space=vmem, size = 0x10000, scoped, tag = 'input window, operand 1']
    #allocation8 [shape = 's32[2]{0}', space=sflag, size = 0x8, scoped, tag = 'scoped memory for tpu_custom_call.1']
    #allocation9 [shape = 'u8[65536]{0}', space=vmem, size = 0x10000, scoped, tag = 'input window, operand 2']
    #allocation10 [shape = 'u8[131072]{0}', space=vmem, size = 0x20000, scoped, tag = 'input window, operand 3']
    #allocation11 [shape = 's32[2]{0}', space=sflag, size = 0x8, scoped, tag = 'scoped memory for tpu_custom_call.1']
    #allocation12 [shape = 'u8[131072]{0}', space=vmem, size = 0x20000, scoped, tag = 'input window, operand 4']
    #allocation13 [shape = 'u8[65536]{0}', space=vmem, size = 0x10000, scoped, tag = 'input window, operand 5, single buffered']
    #allocation14 [shape = 's32[1]{0}', space=sflag, size = 0x4, scoped, tag = 'scoped memory for tpu_custom_call.1']
    #allocation15 [shape = 'u8[65536]{0}', space=vmem, size = 0x10000, scoped, tag = 'input window, operand 6, single buffered']
    #allocation16 [shape = 'u8[131072]{0}', space=vmem, size = 0x20000, scoped, tag = 'output window, operand 2']
    #allocation17 [shape = 'u8[131072]{0}', space=vmem, size = 0x20000, scoped, tag = 'output window, operand 3']
    #allocation18 [shape = 's32[2]{0}', space=sflag, size = 0x8, scoped, tag = 'scoped memory for tpu_custom_call.1']
    %16 = vsyncpa [#allocation5], 0
    %s17 = scalar_lea.sflag [#allocation5], 1
    %18 = vsyncpa %s17, 0
    %19 = vsyncpa [#allocation8], 0
    %s20 = scalar_lea.sflag [#allocation8], 1
    %21 = vsyncpa %s20, 0
    %22 = vsyncpa [#allocation11], 0
    %s23 = scalar_lea.sflag [#allocation11], 1
    %24 = vsyncpa %s23, 0
    %25 = vsyncpa [#allocation14], 0
    %26 = vsyncpa [#allocation6], 0
    %s27 = scalar_lea.sflag [#allocation6], 1
    %28 = vsyncpa %s27, 0
    %29 = vsyncpa [#allocation18], 0
    %s30 = scalar_lea.sflag [#allocation18], 1
    %31 = vsyncpa %s30, 0
    loop: start=0, step=1, limit=6
    $region2: #{tpu_custom_call.1} parent=1 // loop_pre_header
      _
    $region3: #{tpu_custom_call.1} parent=1 // loop_header
      %s33 = sphi 0, %s37
      %p34 = scmp.ge.s32.totalorder %s33, 6
      %s40 = sphi 0, %s52
      %s41 = sphi 0, %s48
      %s42 = sphi 0, %s40
      %s43 = sphi 0, %s41
      %s44 = sphi 0, %s42
      %s45 = sphi 0, %s43
      %s57 = sphi 0, %s59
      %s60 = sphi 0, %s57
      %s61 = sphi 0, %s60
      %s77 = sphi 0, %s61
      %s85 = sphi 0, %s87
      %s88 = sphi 0, %s85
      %s89 = sphi 0, %s88
      %s105 = sphi 0, %s89
      %s113 = sphi 0, %s115
      %s116 = sphi 0, %s113
      %s117 = sphi 0, %s116
      %s133 = sphi 0, %s117
      %s139 = sphi 0, %s141
      %s142 = sphi 0, %s139
      %s143 = sphi 0, %s142
      %s159 = sphi 0, %s143
      %s165 = sphi 0, %s167
      %s168 = sphi 0, %s165
      %s169 = sphi 0, %s168
      %s185 = sphi 0, %s169
      %s189 = sphi 0, %s189
      %s191 = sphi 0, %s189
      %s192 = sphi 0, %s191
      %s206 = sphi 0, %s192
      %s210 = sphi 0, %s210
      %s212 = sphi 0, %s210
      %s213 = sphi 0, %s212
      %s227 = sphi 0, %s213
      %s233 = sphi 0, %s235
      %s236 = sphi 0, %s233
      %s237 = sphi 0, %s236
      %s253 = sphi 0, %s237
      %s259 = sphi 0, %s261
      %s262 = sphi 0, %s259
      %s263 = sphi 0, %s262
      %s279 = sphi 0, %s263
      %s285 = sphi 0, %s287
      %s288 = sphi 0, %s285
      %s289 = sphi 0, %s288
      %s305 = sphi 0, %s289
      %s311 = sphi 0, %s313
      %s314 = sphi 0, %s311
      %s315 = sphi 0, %s314
      %s331 = sphi 0, %s315
    $region4: #{tpu_custom_call.1} parent=1 // loop_header_branch
      %36 = sbr.rel (%p34) target = $region8
    $region5: #{tpu_custom_call.1} parent=1 // loop_body
      %s38 = ssub.s32 %s33, 1
      %s39 = ssub.s32 %s33, 2
      %s46 = sadd.s32 1, %s41
      %p47 = scmp.ge.s32.totalorder %s46, 2
      %s48 = scalar_select %p47, 0, %s46
      %s49 = sadd.s32 1, %s40
      %s50 = scalar_select %p47, %s49, %s40
      %p51 = scmp.ge.s32.totalorder %s50, 2
      %s52 = scalar_select %p51, 0, %s50
      %s53 = ssub.s32 %s40, %s52
      %s54 = ssub.s32 %s41, %s48
      %s55 = sor.u32 %s53, %s54
      %p56 = scmp.eq.s32.totalorder %s55, 0
      %s58 = sadd.s32 %s57, 1
      %s59 = scalar_select %p56, %s57, %s58
      %p62 = pneg %p56
      %p63 = scmp.eq.s32.totalorder %s33, 3
      %p64 = por %p62, %p63
      %p65 = scmp.ne.s32.totalorder %s57, %s60
      %p66 = scmp.eq.s32.totalorder %s33, 0
      %p67 = por %p65, %p66
      %p68 = scmp.ne.s32.totalorder %s57, %s60
      %p69 = scmp.eq.s32.totalorder %s38, 3
      %p70 = por %p68, %p69
      %p71 = scmp.ne.s32.totalorder %s60, %s61
      %p72 = scmp.eq.s32.totalorder %s38, 0
      %p73 = por %p71, %p72
      %p74 = scmp.ne.s32.totalorder %s60, %s61
      %p75 = scmp.eq.s32.totalorder %s39, 3
      %p76 = por %p74, %p75
      %p78 = scmp.ne.s32.totalorder %s61, %s77
      %p79 = scmp.eq.s32.totalorder %s39, 0
      %p80 = por %p78, %p79
      %s81 = ssub.s32 %s40, %s52
      %s82 = ssub.s32 %s41, %s48
      %s83 = sor.u32 %s81, %s82
      %p84 = scmp.eq.s32.totalorder %s83, 0
      %s86 = sadd.s32 %s85, 1
      %s87 = scalar_select %p84, %s85, %s86
      %p90 = pneg %p84
      %p91 = scmp.eq.s32.totalorder %s33, 3
      %p92 = por %p90, %p91
      %p93 = scmp.ne.s32.totalorder %s85, %s88
      %p94 = scmp.eq.s32.totalorder %s33, 0
      %p95 = por %p93, %p94
      %p96 = scmp.ne.s32.totalorder %s85, %s88
      %p97 = scmp.eq.s32.totalorder %s38, 3
      %p98 = por %p96, %p97
      %p99 = scmp.ne.s32.totalorder %s88, %s89
      %p100 = scmp.eq.s32.totalorder %s38, 0
      %p101 = por %p99, %p100
      %p102 = scmp.ne.s32.totalorder %s88, %s89
      %p103 = scmp.eq.s32.totalorder %s39, 3
      %p104 = por %p102, %p103
      %p106 = scmp.ne.s32.totalorder %s89, %s105
      %p107 = scmp.eq.s32.totalorder %s39, 0
      %p108 = por %p106, %p107
      %s109 = ssub.s32 %s40, %s52
      %s110 = ssub.s32 %s41, %s48
      %s111 = sor.u32 %s109, %s110
      %p112 = scmp.eq.s32.totalorder %s111, 0
      %s114 = sadd.s32 %s113, 1
      %s115 = scalar_select %p112, %s113, %s114
      %p118 = pneg %p112
      %p119 = scmp.eq.s32.totalorder %s33, 3
      %p120 = por %p118, %p119
      %p121 = scmp.ne.s32.totalorder %s113, %s116
      %p122 = scmp.eq.s32.totalorder %s33, 0
      %p123 = por %p121, %p122
      %p124 = scmp.ne.s32.totalorder %s113, %s116
      %p125 = scmp.eq.s32.totalorder %s38, 3
      %p126 = por %p124, %p125
      %p127 = scmp.ne.s32.totalorder %s116, %s117
      %p128 = scmp.eq.s32.totalorder %s38, 0
      %p129 = por %p127, %p128
      %p130 = scmp.ne.s32.totalorder %s116, %s117
      %p131 = scmp.eq.s32.totalorder %s39, 3
      %p132 = por %p130, %p131
      %p134 = scmp.ne.s32.totalorder %s117, %s133
      %p135 = scmp.eq.s32.totalorder %s39, 0
      %p136 = por %p134, %p135
      %s137 = ssub.s32 %s40, %s52
      %p138 = scmp.eq.s32.totalorder %s137, 0
      %s140 = sadd.s32 %s139, 1
      %s141 = scalar_select %p138, %s139, %s140
      %p144 = pneg %p138
      %p145 = scmp.eq.s32.totalorder %s33, 3
      %p146 = por %p144, %p145
      %p147 = scmp.ne.s32.totalorder %s139, %s142
      %p148 = scmp.eq.s32.totalorder %s33, 0
      %p149 = por %p147, %p148
      %p150 = scmp.ne.s32.totalorder %s139, %s142
      %p151 = scmp.eq.s32.totalorder %s38, 3
      %p152 = por %p150, %p151
      %p153 = scmp.ne.s32.totalorder %s142, %s143
      %p154 = scmp.eq.s32.totalorder %s38, 0
      %p155 = por %p153, %p154
      %p156 = scmp.ne.s32.totalorder %s142, %s143
      %p157 = scmp.eq.s32.totalorder %s39, 3
      %p158 = por %p156, %p157
      %p160 = scmp.ne.s32.totalorder %s143, %s159
      %p161 = scmp.eq.s32.totalorder %s39, 0
      %p162 = por %p160, %p161
      %s163 = ssub.s32 %s40, %s52
      %p164 = scmp.eq.s32.totalorder %s163, 0
      %s166 = sadd.s32 %s165, 1
      %s167 = scalar_select %p164, %s165, %s166
      %p170 = pneg %p164
      %p171 = scmp.eq.s32.totalorder %s33, 3
      %p172 = por %p170, %p171
      %p173 = scmp.ne.s32.totalorder %s165, %s168
      %p174 = scmp.eq.s32.totalorder %s33, 0
      %p175 = por %p173, %p174
      %p176 = scmp.ne.s32.totalorder %s165, %s168
      %p177 = scmp.eq.s32.totalorder %s38, 3
      %p178 = por %p176, %p177
      %p179 = scmp.ne.s32.totalorder %s168, %s169
      %p180 = scmp.eq.s32.totalorder %s38, 0
      %p181 = por %p179, %p180
      %p182 = scmp.ne.s32.totalorder %s168, %s169
      %p183 = scmp.eq.s32.totalorder %s39, 3
      %p184 = por %p182, %p183
      %p186 = scmp.ne.s32.totalorder %s169, %s185
      %p187 = scmp.eq.s32.totalorder %s39, 0
      %p188 = por %p186, %p187
      %s190 = sadd.s32 %s189, 1
      %p193 = scmp.eq.s32.totalorder %s33, 3
      %p194 = scmp.ne.s32.totalorder %s189, %s191
      %p195 = scmp.eq.s32.totalorder %s33, 0
      %p196 = por %p194, %p195
      %p197 = scmp.ne.s32.totalorder %s189, %s191
      %p198 = scmp.eq.s32.totalorder %s38, 3
      %p199 = por %p197, %p198
      %p200 = scmp.ne.s32.totalorder %s191, %s192
      %p201 = scmp.eq.s32.totalorder %s38, 0
      %p202 = por %p200, %p201
      %p203 = scmp.ne.s32.totalorder %s191, %s192
      %p204 = scmp.eq.s32.totalorder %s39, 3
      %p205 = por %p203, %p204
      %p207 = scmp.ne.s32.totalorder %s192, %s206
      %p208 = scmp.eq.s32.totalorder %s39, 0
      %p209 = por %p207, %p208
      %s211 = sadd.s32 %s210, 1
      %p214 = scmp.eq.s32.totalorder %s33, 3
      %p215 = scmp.ne.s32.totalorder %s210, %s212
      %p216 = scmp.eq.s32.totalorder %s33, 0
      %p217 = por %p215, %p216
      %p218 = scmp.ne.s32.totalorder %s210, %s212
      %p219 = scmp.eq.s32.totalorder %s38, 3
      %p220 = por %p218, %p219
      %p221 = scmp.ne.s32.totalorder %s212, %s213
      %p222 = scmp.eq.s32.totalorder %s38, 0
      %p223 = por %p221, %p222
      %p224 = scmp.ne.s32.totalorder %s212, %s213
      %p225 = scmp.eq.s32.totalorder %s39, 3
      %p226 = por %p224, %p225
      %p228 = scmp.ne.s32.totalorder %s213, %s227
      %p229 = scmp.eq.s32.totalorder %s39, 0
      %p230 = por %p228, %p229
      %s231 = ssub.s32 %s40, %s52
      %p232 = scmp.eq.s32.totalorder %s231, 0
      %s234 = sadd.s32 %s233, 1
      %s235 = scalar_select %p232, %s233, %s234
      %p238 = pneg %p232
      %p239 = scmp.eq.s32.totalorder %s33, 3
      %p240 = por %p238, %p239
      %p241 = scmp.ne.s32.totalorder %s233, %s236
      %p242 = scmp.eq.s32.totalorder %s33, 0
      %p243 = por %p241, %p242
      %p244 = scmp.ne.s32.totalorder %s233, %s236
      %p245 = scmp.eq.s32.totalorder %s38, 3
      %p246 = por %p244, %p245
      %p247 = scmp.ne.s32.totalorder %s236, %s237
      %p248 = scmp.eq.s32.totalorder %s38, 0
      %p249 = por %p247, %p248
      %p250 = scmp.ne.s32.totalorder %s236, %s237
      %p251 = scmp.eq.s32.totalorder %s39, 3
      %p252 = por %p250, %p251
      %p254 = scmp.ne.s32.totalorder %s237, %s253
      %p255 = scmp.eq.s32.totalorder %s39, 0
      %p256 = por %p254, %p255
      %s257 = ssub.s32 %s40, %s52
      %p258 = scmp.eq.s32.totalorder %s257, 0
      %s260 = sadd.s32 %s259, 1
      %s261 = scalar_select %p258, %s259, %s260
      %p264 = pneg %p258
      %p265 = scmp.eq.s32.totalorder %s33, 3
      %p266 = por %p264, %p265
      %p267 = scmp.ne.s32.totalorder %s259, %s262
      %p268 = scmp.eq.s32.totalorder %s33, 0
      %p269 = por %p267, %p268
      %p270 = scmp.ne.s32.totalorder %s259, %s262
      %p271 = scmp.eq.s32.totalorder %s38, 3
      %p272 = por %p270, %p271
      %p273 = scmp.ne.s32.totalorder %s262, %s263
      %p274 = scmp.eq.s32.totalorder %s38, 0
      %p275 = por %p273, %p274
      %p276 = scmp.ne.s32.totalorder %s262, %s263
      %p277 = scmp.eq.s32.totalorder %s39, 3
      %p278 = por %p276, %p277
      %p280 = scmp.ne.s32.totalorder %s263, %s279
      %p281 = scmp.eq.s32.totalorder %s39, 0
      %p282 = por %p280, %p281
      %s283 = ssub.s32 %s40, %s52
      %p284 = scmp.eq.s32.totalorder %s283, 0
      %s286 = sadd.s32 %s285, 1
      %s287 = scalar_select %p284, %s285, %s286
      %p290 = pneg %p284
      %p291 = scmp.eq.s32.totalorder %s33, 3
      %p292 = por %p290, %p291
      %p293 = scmp.ne.s32.totalorder %s285, %s288
      %p294 = scmp.eq.s32.totalorder %s33, 0
      %p295 = por %p293, %p294
      %p296 = scmp.ne.s32.totalorder %s285, %s288
      %p297 = scmp.eq.s32.totalorder %s38, 3
      %p298 = por %p296, %p297
      %p299 = scmp.ne.s32.totalorder %s288, %s289
      %p300 = scmp.eq.s32.totalorder %s38, 0
      %p301 = por %p299, %p300
      %p302 = scmp.ne.s32.totalorder %s288, %s289
      %p303 = scmp.eq.s32.totalorder %s39, 3
      %p304 = por %p302, %p303
      %p306 = scmp.ne.s32.totalorder %s289, %s305
      %p307 = scmp.eq.s32.totalorder %s39, 0
      %p308 = por %p306, %p307
      %s309 = ssub.s32 %s40, %s52
      %p310 = scmp.eq.s32.totalorder %s309, 0
      %s312 = sadd.s32 %s311, 1
      %s313 = scalar_select %p310, %s311, %s312
      %p316 = pneg %p310
      %p317 = scmp.eq.s32.totalorder %s33, 3
      %p318 = por %p316, %p317
      %p319 = scmp.ne.s32.totalorder %s311, %s314
      %p320 = scmp.eq.s32.totalorder %s33, 0
      %p321 = por %p319, %p320
      %p322 = scmp.ne.s32.totalorder %s311, %s314
      %p323 = scmp.eq.s32.totalorder %s38, 3
      %p324 = por %p322, %p323
      %p325 = scmp.ne.s32.totalorder %s314, %s315
      %p326 = scmp.eq.s32.totalorder %s38, 0
      %p327 = por %p325, %p326
      %p328 = scmp.ne.s32.totalorder %s314, %s315
      %p329 = scmp.eq.s32.totalorder %s39, 3
      %p330 = por %p328, %p329
      %p332 = scmp.ne.s32.totalorder %s315, %s331
      %p333 = scmp.eq.s32.totalorder %s39, 0
      %p334 = por %p332, %p333
      %p335 = scmp.le.s32.totalorder 1, %s33
      %p336 = scmp.lt.s32.totalorder %s33, 5
      %p337 = pnand %p335, %p336
      %p338 = pneg %p337
      // Predicated region
      $region9: #{tpu_custom_call.1} parent=5 // pred_check
        _
      $region10: #{tpu_custom_call.1} parent=5 // pred_check_branch
        %340 = sbr.rel (%p337) target = $region12
      $region11: #{tpu_custom_call.1} parent=5 // pred_region
        %s341 = ssub.s32 %s33, 1
        // Predicated region
        $region13: #{tpu_custom_call.1} parent=11 // pred_check
          %p342 = pneg %p202
        $region14: #{tpu_custom_call.1} parent=11 // pred_check_branch
          %344 = sbr.rel (%p342) target = $region16
        $region15: #{tpu_custom_call.1} parent=11 // pred_region
          %s346 = ssub.s32 2048, 2048
          %347 = vsyncadd [#allocation14], %s346
          %s348 = sshll.u32 [#allocation13], 4
          %s349 = int_to_ptr.vmem [resolvable:$true] %s348
          %354 = dma.hbm_to_vmem [thread:$0]  %s5, 2048, %s349, [#allocation14], 128, 128, 8
        $region16: #{tpu_custom_call.1} parent=11 // pred_fallthru
          _
        // Predicated region
        $region17: #{tpu_custom_call.1} parent=11 // pred_check
          %p355 = pneg %p223
        $region18: #{tpu_custom_call.1} parent=11 // pred_check_branch
          %357 = sbr.rel (%p355) target = $region20
        $region19: #{tpu_custom_call.1} parent=11 // pred_region
          %s359 = ssub.s32 2048, 2048
          %360 = vsyncadd [#allocation14], %s359
          %s361 = sshll.u32 [#allocation15], 4
          %s362 = int_to_ptr.vmem [resolvable:$true] %s361
          %367 = dma.hbm_to_vmem [thread:$0]  %s6, 2048, %s362, [#allocation14], 128, 128, 8
        $region20: #{tpu_custom_call.1} parent=11 // pred_fallthru
          _
      $region12: #{tpu_custom_call.1} parent=5 // pred_fallthru
        _
      %p368 = scmp.lt.s32.totalorder %s33, 4
      // Predicated region
      $region21: #{tpu_custom_call.1} parent=5 // pred_check
        %p369 = pneg %p368
      $region22: #{tpu_custom_call.1} parent=5 // pred_check_branch
        %371 = sbr.rel (%p369) target = $region24
      $region23: #{tpu_custom_call.1} parent=5 // pred_region
        // Predicated region
        $region25: #{tpu_custom_call.1} parent=23 // pred_check
          %p372 = pneg %p67
        $region26: #{tpu_custom_call.1} parent=23 // pred_check_branch
          %374 = sbr.rel (%p372) target = $region28
        $region27: #{tpu_custom_call.1} parent=23 // pred_region
          %s375 = sand.u32 %s57, 1
          %s376 = scalar_lea.sflag [#allocation5], %s375
          %s377 = sand.u32 %s57, 1
          %s378 = smul.addr %s377, 64
          %s379 = scalar_lea.vmem [#allocation4], %s378
          %s380 = smul.u32 16, %s40
          %s382 = ssub.s32 1024, 1024
          %383 = vsyncadd %s376, %s382
          %s384 = smul.addr %s380, 2
          %s385 = sadd.s32 %s41, %s384
          %s386 = smul.addr %s385, 64
          %s387 = scalar_lea.hbm %s0, %s386
          %s388 = sshll.u32 %s379, 4
          %s389 = int_to_ptr.vmem [resolvable:$true] %s388
          %394 = dma.hbm_to_vmem [thread:$0]  %s387, 1024, %s389, %s376, 128, 64, 4
        $region28: #{tpu_custom_call.1} parent=23 // pred_fallthru
          _
        // Predicated region
        $region29: #{tpu_custom_call.1} parent=23 // pred_check
          %p395 = pneg %p95
        $region30: #{tpu_custom_call.1} parent=23 // pred_check_branch
          %397 = sbr.rel (%p395) target = $region32
        $region31: #{tpu_custom_call.1} parent=23 // pred_region
          %s398 = sand.u32 %s33, 1
          %s399 = scalar_lea.sflag [#allocation8], %s398
          %s400 = sand.u32 %s85, 1
          %s401 = smul.addr %s400, 64
          %s402 = scalar_lea.vmem [#allocation7], %s401
          %s403 = smul.u32 16, %s40
          %s405 = ssub.s32 1024, 1024
          %406 = vsyncadd %s399, %s405
          %s407 = smul.addr %s403, 2
          %s408 = sadd.s32 %s41, %s407
          %s409 = smul.addr %s408, 64
          %s410 = scalar_lea.hbm %s1, %s409
          %s411 = sshll.u32 %s402, 4
          %s412 = int_to_ptr.vmem [resolvable:$true] %s411
          %417 = dma.hbm_to_vmem [thread:$0]  %s410, 1024, %s412, %s399, 128, 64, 4
        $region32: #{tpu_custom_call.1} parent=23 // pred_fallthru
          _
        // Predicated region
        $region33: #{tpu_custom_call.1} parent=23 // pred_check
          %p418 = pneg %p123
        $region34: #{tpu_custom_call.1} parent=23 // pred_check_branch
          %420 = sbr.rel (%p418) target = $region36
        $region35: #{tpu_custom_call.1} parent=23 // pred_region
          %s421 = sand.u32 %s33, 1
          %s422 = scalar_lea.sflag [#allocation8], %s421
          %s423 = sand.u32 %s113, 1
          %s424 = smul.addr %s423, 64
          %s425 = scalar_lea.vmem [#allocation9], %s424
          %s426 = smul.u32 16, %s40
          %s428 = ssub.s32 1024, 1024
          %429 = vsyncadd %s422, %s428
          %s430 = smul.addr %s426, 2
          %s431 = sadd.s32 %s41, %s430
          %s432 = smul.addr %s431, 64
          %s433 = scalar_lea.hbm %s2, %s432
          %s434 = sshll.u32 %s425, 4
          %s435 = int_to_ptr.vmem [resolvable:$true] %s434
          %440 = dma.hbm_to_vmem [thread:$0]  %s433, 1024, %s435, %s422, 128, 64, 4
        $region36: #{tpu_custom_call.1} parent=23 // pred_fallthru
          _
        // Predicated region
        $region37: #{tpu_custom_call.1} parent=23 // pred_check
          %p441 = pneg %p149
        $region38: #{tpu_custom_call.1} parent=23 // pred_check_branch
          %443 = sbr.rel (%p441) target = $region40
        $region39: #{tpu_custom_call.1} parent=23 // pred_region
          %s444 = sand.u32 %s33, 1
          %s445 = scalar_lea.sflag [#allocation11], %s444
          %s446 = sand.u32 %s139, 1
          %s447 = smul.addr %s446, 128
          %s448 = scalar_lea.vmem [#allocation10], %s447
          %s449 = smul.u32 16, %s40
          %s451 = ssub.s32 2048, 2048
          %452 = vsyncadd %s445, %s451
          %s453 = smul.addr %s449, 128
          %s454 = scalar_lea.hbm %s3, %s453
          %s455 = sshll.u32 %s448, 4
          %s456 = int_to_ptr.vmem [resolvable:$true] %s455
          %461 = dma.hbm_to_vmem [thread:$0]  %s454, 2048, %s456, %s445, 128, 128, 8
        $region40: #{tpu_custom_call.1} parent=23 // pred_fallthru
          _
        // Predicated region
        $region41: #{tpu_custom_call.1} parent=23 // pred_check
          %p462 = pneg %p175
        $region42: #{tpu_custom_call.1} parent=23 // pred_check_branch
          %464 = sbr.rel (%p462) target = $region44
        $region43: #{tpu_custom_call.1} parent=23 // pred_region
          %s465 = sand.u32 %s33, 1
          %s466 = scalar_lea.sflag [#allocation11], %s465
          %s467 = sand.u32 %s165, 1
          %s468 = smul.addr %s467, 128
          %s469 = scalar_lea.vmem [#allocation12], %s468
          %s470 = smul.u32 16, %s40
          %s472 = ssub.s32 2048, 2048
          %473 = vsyncadd %s466, %s472
          %s474 = smul.addr %s470, 128
          %s475 = scalar_lea.hbm %s4, %s474
          %s476 = sshll.u32 %s469, 4
          %s477 = int_to_ptr.vmem [resolvable:$true] %s476
          %482 = dma.hbm_to_vmem [thread:$0]  %s475, 2048, %s477, %s466, 128, 128, 8
        $region44: #{tpu_custom_call.1} parent=23 // pred_fallthru
          _
      $region24: #{tpu_custom_call.1} parent=5 // pred_fallthru
        _
      %p483 = scmp.le.s32.totalorder 1, %s33
      %p484 = scmp.lt.s32.totalorder %s33, 5
      %p485 = pnand %p483, %p484
      %p486 = pneg %p485
      // Predicated region
      $region45: #{tpu_custom_call.1} parent=5 // pred_check
        _
      $region46: #{tpu_custom_call.1} parent=5 // pred_check_branch
        %488 = sbr.rel (%p485) target = $region48
      $region47: #{tpu_custom_call.1} parent=5 // pred_region
        %s489 = ssub.s32 %s33, 1
        %s490 = sand.u32 %s60, 1
        %s491 = scalar_lea.sflag [#allocation5], %s490
        %s492 = sand.u32 %s60, 1
        %s493 = smul.addr %s492, 64
        %s494 = scalar_lea.vmem [#allocation4], %s493
        // Predicated region
        $region49: #{tpu_custom_call.1} parent=47 // pred_check
          %p495 = pneg %p73
        $region50: #{tpu_custom_call.1} parent=47 // pred_check_branch
          %497 = sbr.rel (%p495) target = $region52
        $region51: #{tpu_custom_call.1} parent=47 // pred_region
          %498 = dma.done %s491, 1024
        $region52: #{tpu_custom_call.1} parent=47 // pred_fallthru
          _
        %s499 = sand.u32 %s38, 1
        %s500 = scalar_lea.sflag [#allocation8], %s499
        %s501 = sand.u32 %s88, 1
        %s502 = smul.addr %s501, 64
        %s503 = scalar_lea.vmem [#allocation7], %s502
        // Predicated region
        $region53: #{tpu_custom_call.1} parent=47 // pred_check
          %p504 = pneg %p101
        $region54: #{tpu_custom_call.1} parent=47 // pred_check_branch
          %506 = sbr.rel (%p504) target = $region56
        $region55: #{tpu_custom_call.1} parent=47 // pred_region
          %507 = dma.done %s500, 1024
        $region56: #{tpu_custom_call.1} parent=47 // pred_fallthru
          _
        %s508 = sand.u32 %s38, 1
        %s509 = scalar_lea.sflag [#allocation8], %s508
        %s510 = sand.u32 %s116, 1
        %s511 = smul.addr %s510, 64
        %s512 = scalar_lea.vmem [#allocation9], %s511
        // Predicated region
        $region57: #{tpu_custom_call.1} parent=47 // pred_check
          %p513 = pneg %p129
        $region58: #{tpu_custom_call.1} parent=47 // pred_check_branch
          %515 = sbr.rel (%p513) target = $region60
        $region59: #{tpu_custom_call.1} parent=47 // pred_region
          %516 = dma.done %s509, 1024
        $region60: #{tpu_custom_call.1} parent=47 // pred_fallthru
          _
        %s517 = sand.u32 %s38, 1
        %s518 = scalar_lea.sflag [#allocation11], %s517
        %s519 = sand.u32 %s142, 1
        %s520 = smul.addr %s519, 128
        %s521 = scalar_lea.vmem [#allocation10], %s520
        // Predicated region
        $region61: #{tpu_custom_call.1} parent=47 // pred_check
          %p522 = pneg %p155
        $region62: #{tpu_custom_call.1} parent=47 // pred_check_branch
          %524 = sbr.rel (%p522) target = $region64
        $region63: #{tpu_custom_call.1} parent=47 // pred_region
          %525 = dma.done %s518, 2048
        $region64: #{tpu_custom_call.1} parent=47 // pred_fallthru
          _
        %s526 = sand.u32 %s38, 1
        %s527 = scalar_lea.sflag [#allocation11], %s526
        %s528 = sand.u32 %s168, 1
        %s529 = smul.addr %s528, 128
        %s530 = scalar_lea.vmem [#allocation12], %s529
        // Predicated region
        $region65: #{tpu_custom_call.1} parent=47 // pred_check
          %p531 = pneg %p181
        $region66: #{tpu_custom_call.1} parent=47 // pred_check_branch
          %533 = sbr.rel (%p531) target = $region68
        $region67: #{tpu_custom_call.1} parent=47 // pred_region
          %534 = dma.done %s527, 2048
        $region68: #{tpu_custom_call.1} parent=47 // pred_fallthru
          _
        // Predicated region
        $region69: #{tpu_custom_call.1} parent=47 // pred_check
          %p535 = pneg %p202
        $region70: #{tpu_custom_call.1} parent=47 // pred_check_branch
          %537 = sbr.rel (%p535) target = $region72
        $region71: #{tpu_custom_call.1} parent=47 // pred_region
          %538 = dma.done [#allocation14], 2048
        $region72: #{tpu_custom_call.1} parent=47 // pred_fallthru
          _
        // Predicated region
        $region73: #{tpu_custom_call.1} parent=47 // pred_check
          %p539 = pneg %p223
        $region74: #{tpu_custom_call.1} parent=47 // pred_check_branch
          %541 = sbr.rel (%p539) target = $region76
        $region75: #{tpu_custom_call.1} parent=47 // pred_region
          %542 = dma.done [#allocation14], 2048
        $region76: #{tpu_custom_call.1} parent=47 // pred_fallthru
          _
        %s543 = sand.u32 %s60, 1
        %s544 = scalar_lea.sflag [#allocation5], %s543
        %s545 = sand.u32 %s60, 1
        %s546 = smul.addr %s545, 64
        %s547 = scalar_lea.vmem [#allocation4], %s546
        %p548 = pneg %p73
        %p549 = pneg %p70
        %s550 = sand.u32 %s38, 1
        %s551 = scalar_lea.sflag [#allocation8], %s550
        %s552 = sand.u32 %s88, 1
        %s553 = smul.addr %s552, 64
        %s554 = scalar_lea.vmem [#allocation7], %s553
        %p555 = pneg %p101
        %p556 = pneg %p98
        %s557 = sand.u32 %s38, 1
        %s558 = scalar_lea.sflag [#allocation8], %s557
        %s559 = sand.u32 %s116, 1
        %s560 = smul.addr %s559, 64
        %s561 = scalar_lea.vmem [#allocation9], %s560
        %p562 = pneg %p129
        %p563 = pneg %p126
        %s564 = sand.u32 %s38, 1
        %s565 = scalar_lea.sflag [#allocation11], %s564
        %s566 = sand.u32 %s142, 1
        %s567 = smul.addr %s566, 128
        %s568 = scalar_lea.vmem [#allocation10], %s567
        %p569 = pneg %p155
        %p570 = pneg %p152
        %s571 = sand.u32 %s38, 1
        %s572 = scalar_lea.sflag [#allocation11], %s571
        %s573 = sand.u32 %s168, 1
        %s574 = smul.addr %s573, 128
        %s575 = scalar_lea.vmem [#allocation12], %s574
        %p576 = pneg %p181
        %p577 = pneg %p178
        %p578 = pneg %p202
        %p579 = pneg %p199
        %p580 = pneg %p223
        %p581 = pneg %p220
        %p582 = pneg %p249
        %p583 = pneg %p246
        %s584 = smul.u32 16, %s42
        %p585 = scmp.lt.s32.totalorder %s584, 31
        %s586 = scalar_select %p585, %s584, 31
        %s587 = smul.addr %s586, 8
        %s588 = scalar_lea.vmem %s7, %s587
        %p589 = pneg %p275
        %p590 = pneg %p272
        %s591 = smul.u32 16, %s42
        %p592 = scmp.lt.s32.totalorder %s591, 31
        %s593 = scalar_select %p592, %s591, 31
        %s594 = smul.addr %s593, 8
        %s595 = scalar_lea.vmem %s8, %s594
        %p596 = pneg %p301
        %p597 = pneg %p298
        %s598 = sand.u32 %s288, 1
        %s599 = scalar_lea.sflag [#allocation6], %s598
        %s600 = sand.u32 %s288, 1
        %s601 = smul.addr %s600, 128
        %s602 = scalar_lea.vmem [#allocation16], %s601
        %p603 = pneg %p327
        %p604 = pneg %p324
        %s605 = sand.u32 %s314, 1
        %s606 = scalar_lea.sflag [#allocation18], %s605
        %s607 = sand.u32 %s314, 1
        %s608 = smul.addr %s607, 128
        %s609 = scalar_lea.vmem [#allocation17], %s608
        %s610 = smul.u32 16, %s42
        %s611 = smul.u32 16, %s42
        %s612 = smul.u32 16, %s42
        %s613 = smul.u32 16, %s42
        %s614 = smul.u32 16, %s42
        %s615 = smul.u32 16, %s42
        %p616 = scmp.lt.s32.totalorder %s615, 31
        %s617 = scalar_select %p616, %s615, 31
        %s618 = smul.addr %s617, 8
        %s619 = scalar_lea.vmem %s7, %s618
        %s620 = smul.u32 16, %s42
        %s621 = smul.u32 16, %s42
        %p622 = scmp.lt.s32.totalorder %s621, 31
        %s623 = scalar_select %p622, %s621, 31
        %s624 = smul.addr %s623, 8
        %s625 = scalar_lea.vmem %s8, %s624
        %s626 = smul.u32 16, %s42
        %s627 = smul.u32 16, %s42
        %s628 = smul.u32 16, %s42
        %p629 = scmp.eq.s32.totalorder %s43, 0
        // Predicated region
        $region77: #{tpu_custom_call.1} parent=47 // pred_check
          %p630 = pneg %p629
        $region78: #{tpu_custom_call.1} parent=47 // pred_check_branch
          %632 = sbr.rel (%p630) target = $region80
        $region79: #{tpu_custom_call.1} parent=47 // pred_region
          %vm633 = vcmask 7168
          %634 = vst.msk [vmem:[#allocation2] sm:$0xff] %vm633, 0.0
          %635 = vst.msk [vmem:[#allocation2 + $0x8] sm:$0xff] %vm633, 0.0
          %636 = vst.msk [vmem:[#allocation2 + $0x10] sm:$0xff] %vm633, 0.0
          %637 = vst.msk [vmem:[#allocation2 + $0x18] sm:$0xff] %vm633, 0.0
          %638 = vst.msk [vmem:[#allocation2 + $0x20] sm:$0xff] %vm633, 0.0
          %639 = vst.msk [vmem:[#allocation2 + $0x28] sm:$0xff] %vm633, 0.0
          %640 = vst.msk [vmem:[#allocation2 + $0x30] sm:$0xff] %vm633, 0.0
          %641 = vst.msk [vmem:[#allocation2 + $0x38] sm:$0xff] %vm633, 0.0
          %642 = vst.msk [vmem:[#allocation2 + $0x40] sm:$0xff] %vm633, 0.0
          %643 = vst.msk [vmem:[#allocation2 + $0x48] sm:$0xff] %vm633, 0.0
          %644 = vst.msk [vmem:[#allocation2 + $0x50] sm:$0xff] %vm633, 0.0
          %645 = vst.msk [vmem:[#allocation2 + $0x58] sm:$0xff] %vm633, 0.0
          %646 = vst.msk [vmem:[#allocation2 + $0x60] sm:$0xff] %vm633, 0.0
          %647 = vst.msk [vmem:[#allocation2 + $0x68] sm:$0xff] %vm633, 0.0
          %648 = vst.msk [vmem:[#allocation2 + $0x70] sm:$0xff] %vm633, 0.0
          %649 = vst.msk [vmem:[#allocation2 + $0x78] sm:$0xff] %vm633, 0.0
          %650 = vst.msk [vmem:[#allocation3] sm:$0xff] %vm633, 0.0
          %651 = vst.msk [vmem:[#allocation3 + $0x8] sm:$0xff] %vm633, 0.0
          %652 = vst.msk [vmem:[#allocation3 + $0x10] sm:$0xff] %vm633, 0.0
          %653 = vst.msk [vmem:[#allocation3 + $0x18] sm:$0xff] %vm633, 0.0
          %654 = vst.msk [vmem:[#allocation3 + $0x20] sm:$0xff] %vm633, 0.0
          %655 = vst.msk [vmem:[#allocation3 + $0x28] sm:$0xff] %vm633, 0.0
          %656 = vst.msk [vmem:[#allocation3 + $0x30] sm:$0xff] %vm633, 0.0
          %657 = vst.msk [vmem:[#allocation3 + $0x38] sm:$0xff] %vm633, 0.0
          %658 = vst.msk [vmem:[#allocation3 + $0x40] sm:$0xff] %vm633, 0.0
          %659 = vst.msk [vmem:[#allocation3 + $0x48] sm:$0xff] %vm633, 0.0
          %660 = vst.msk [vmem:[#allocation3 + $0x50] sm:$0xff] %vm633, 0.0
          %661 = vst.msk [vmem:[#allocation3 + $0x58] sm:$0xff] %vm633, 0.0
          %662 = vst.msk [vmem:[#allocation3 + $0x60] sm:$0xff] %vm633, 0.0
          %663 = vst.msk [vmem:[#allocation3 + $0x68] sm:$0xff] %vm633, 0.0
          %664 = vst.msk [vmem:[#allocation3 + $0x70] sm:$0xff] %vm633, 0.0
          %665 = vst.msk [vmem:[#allocation3 + $0x78] sm:$0xff] %vm633, 0.0
        $region80: #{tpu_custom_call.1} parent=47 // pred_fallthru
          _
        %v666 = vld [vmem:[%s494] sm:$0xf]
        %v667 = vld [vmem:[%s494 + $0x4] sm:$0xf]
        %v668 = vld [vmem:[%s494 + $0x8] sm:$0xf]
        %v669 = vld [vmem:[%s494 + $0xc] sm:$0xf]
        %v670 = vld [vmem:[%s494 + $0x10] sm:$0xf]
        %v671 = vld [vmem:[%s494 + $0x14] sm:$0xf]
        %v672 = vld [vmem:[%s494 + $0x18] sm:$0xf]
        %v673 = vld [vmem:[%s494 + $0x1c] sm:$0xf]
        %v674 = vld [vmem:[%s494 + $0x20] sm:$0xf]
        %v675 = vld [vmem:[%s494 + $0x24] sm:$0xf]
        %v676 = vld [vmem:[%s494 + $0x28] sm:$0xf]
        %v677 = vld [vmem:[%s494 + $0x2c] sm:$0xf]
        %v678 = vld [vmem:[%s494 + $0x30] sm:$0xf]
        %v679 = vld [vmem:[%s494 + $0x34] sm:$0xf]
        %v680 = vld [vmem:[%s494 + $0x38] sm:$0xf]
        %v681 = vld [vmem:[%s494 + $0x3c] sm:$0xf]
        %v682 = vunpack.c.l.bf16 %v666
        %v683 = vunpack.c.l.bf16 %v667
        %v684 = vunpack.c.l.bf16 %v668
        %v685 = vunpack.c.l.bf16 %v669
        %v686 = vunpack.c.l.bf16 %v670
        %v687 = vunpack.c.l.bf16 %v671
        %v688 = vunpack.c.l.bf16 %v672
        %v689 = vunpack.c.l.bf16 %v673
        %v690 = vunpack.c.l.bf16 %v674
        %v691 = vunpack.c.l.bf16 %v675
        %v692 = vunpack.c.l.bf16 %v676
        %v693 = vunpack.c.l.bf16 %v677
        %v694 = vunpack.c.l.bf16 %v678
        %v695 = vunpack.c.l.bf16 %v679
        %v696 = vunpack.c.l.bf16 %v680
        %v697 = vunpack.c.l.bf16 %v681
        %v698 = vld [vmem:[%s503] sm:$0xf]
        %v699 = vld [vmem:[%s503 + $0x4] sm:$0xf]
        %v700 = vld [vmem:[%s503 + $0x8] sm:$0xf]
        %v701 = vld [vmem:[%s503 + $0xc] sm:$0xf]
        %v702 = vld [vmem:[%s503 + $0x10] sm:$0xf]
        %v703 = vld [vmem:[%s503 + $0x14] sm:$0xf]
        %v704 = vld [vmem:[%s503 + $0x18] sm:$0xf]
        %v705 = vld [vmem:[%s503 + $0x1c] sm:$0xf]
        %v706 = vld [vmem:[%s503 + $0x20] sm:$0xf]
        %v707 = vld [vmem:[%s503 + $0x24] sm:$0xf]
        %v708 = vld [vmem:[%s503 + $0x28] sm:$0xf]
        %v709 = vld [vmem:[%s503 + $0x2c] sm:$0xf]
        %v710 = vld [vmem:[%s503 + $0x30] sm:$0xf]
        %v711 = vld [vmem:[%s503 + $0x34] sm:$0xf]
        %v712 = vld [vmem:[%s503 + $0x38] sm:$0xf]
        %v713 = vld [vmem:[%s503 + $0x3c] sm:$0xf]
        %v714 = vunpack.c.l.bf16 %v698
        %v715 = vunpack.c.l.bf16 %v699
        %v716 = vunpack.c.l.bf16 %v700
        %v717 = vunpack.c.l.bf16 %v701
        %v718 = vunpack.c.l.bf16 %v702
        %v719 = vunpack.c.l.bf16 %v703
        %v720 = vunpack.c.l.bf16 %v704
        %v721 = vunpack.c.l.bf16 %v705
        %v722 = vunpack.c.l.bf16 %v706
        %v723 = vunpack.c.l.bf16 %v707
        %v724 = vunpack.c.l.bf16 %v708
        %v725 = vunpack.c.l.bf16 %v709
        %v726 = vunpack.c.l.bf16 %v710
        %v727 = vunpack.c.l.bf16 %v711
        %v728 = vunpack.c.l.bf16 %v712
        %v729 = vunpack.c.l.bf16 %v713
        %v730 = vsub.f32 1.0, %v714
        %v731 = vsub.f32 1.0, %v715
        %v732 = vsub.f32 1.0, %v716
        %v733 = vsub.f32 1.0, %v717
        %v734 = vsub.f32 1.0, %v718
        %v735 = vsub.f32 1.0, %v719
        %v736 = vsub.f32 1.0, %v720
        %v737 = vsub.f32 1.0, %v721
        %v738 = vsub.f32 1.0, %v722
        %v739 = vsub.f32 1.0, %v723
        %v740 = vsub.f32 1.0, %v724
        %v741 = vsub.f32 1.0, %v725
        %v742 = vsub.f32 1.0, %v726
        %v743 = vsub.f32 1.0, %v727
        %v744 = vsub.f32 1.0, %v728
        %v745 = vsub.f32 1.0, %v729
        %v746 = vmul.f32 %v682, %v730
        %v747 = vmul.f32 %v683, %v731
        %v748 = vmul.f32 %v684, %v732
        %v749 = vmul.f32 %v685, %v733
        %v750 = vmul.f32 %v686, %v734
        %v751 = vmul.f32 %v687, %v735
        %v752 = vmul.f32 %v688, %v736
        %v753 = vmul.f32 %v689, %v737
        %v754 = vmul.f32 %v690, %v738
        %v755 = vmul.f32 %v691, %v739
        %v756 = vmul.f32 %v692, %v740
        %v757 = vmul.f32 %v693, %v741
        %v758 = vmul.f32 %v694, %v742
        %v759 = vmul.f32 %v695, %v743
        %v760 = vmul.f32 %v696, %v744
        %v761 = vmul.f32 %v697, %v745
        %v762 = vld [vmem:[%s512] sm:$0xf]
        %v763 = vld [vmem:[%s512 + $0x4] sm:$0xf]
        %v764 = vld [vmem:[%s512 + $0x8] sm:$0xf]
        %v765 = vld [vmem:[%s512 + $0xc] sm:$0xf]
        %v766 = vld [vmem:[%s512 + $0x10] sm:$0xf]
        %v767 = vld [vmem:[%s512 + $0x14] sm:$0xf]
        %v768 = vld [vmem:[%s512 + $0x18] sm:$0xf]
        %v769 = vld [vmem:[%s512 + $0x1c] sm:$0xf]
        %v770 = vld [vmem:[%s512 + $0x20] sm:$0xf]
        %v771 = vld [vmem:[%s512 + $0x24] sm:$0xf]
        %v772 = vld [vmem:[%s512 + $0x28] sm:$0xf]
        %v773 = vld [vmem:[%s512 + $0x2c] sm:$0xf]
        %v774 = vld [vmem:[%s512 + $0x30] sm:$0xf]
        %v775 = vld [vmem:[%s512 + $0x34] sm:$0xf]
        %v776 = vld [vmem:[%s512 + $0x38] sm:$0xf]
        %v777 = vld [vmem:[%s512 + $0x3c] sm:$0xf]
        %v778 = vunpack.c.l.bf16 %v762
        %v779 = vunpack.c.l.bf16 %v763
        %v780 = vunpack.c.l.bf16 %v764
        %v781 = vunpack.c.l.bf16 %v765
        %v782 = vunpack.c.l.bf16 %v766
        %v783 = vunpack.c.l.bf16 %v767
        %v784 = vunpack.c.l.bf16 %v768
        %v785 = vunpack.c.l.bf16 %v769
        %v786 = vunpack.c.l.bf16 %v770
        %v787 = vunpack.c.l.bf16 %v771
        %v788 = vunpack.c.l.bf16 %v772
        %v789 = vunpack.c.l.bf16 %v773
        %v790 = vunpack.c.l.bf16 %v774
        %v791 = vunpack.c.l.bf16 %v775
        %v792 = vunpack.c.l.bf16 %v776
        %v793 = vunpack.c.l.bf16 %v777
        %v794 = vsub.f32 1.0, %v778
        %v795 = vsub.f32 1.0, %v779
        %v796 = vsub.f32 1.0, %v780
        %v797 = vsub.f32 1.0, %v781
        %v798 = vsub.f32 1.0, %v782
        %v799 = vsub.f32 1.0, %v783
        %v800 = vsub.f32 1.0, %v784
        %v801 = vsub.f32 1.0, %v785
        %v802 = vsub.f32 1.0, %v786
        %v803 = vsub.f32 1.0, %v787
        %v804 = vsub.f32 1.0, %v788
        %v805 = vsub.f32 1.0, %v789
        %v806 = vsub.f32 1.0, %v790
        %v807 = vsub.f32 1.0, %v791
        %v808 = vsub.f32 1.0, %v792
        %v809 = vsub.f32 1.0, %v793
        %v810 = vmul.f32 %v682, %v794
        %v811 = vmul.f32 %v683, %v795
        %v812 = vmul.f32 %v684, %v796
        %v813 = vmul.f32 %v685, %v797
        %v814 = vmul.f32 %v686, %v798
        %v815 = vmul.f32 %v687, %v799
        %v816 = vmul.f32 %v688, %v800
        %v817 = vmul.f32 %v689, %v801
        %v818 = vmul.f32 %v690, %v802
        %v819 = vmul.f32 %v691, %v803
        %v820 = vmul.f32 %v692, %v804
        %v821 = vmul.f32 %v693, %v805
        %v822 = vmul.f32 %v694, %v806
        %v823 = vmul.f32 %v695, %v807
        %v824 = vmul.f32 %v696, %v808
        %v825 = vmul.f32 %v697, %v809
        %v826 = vld [vmem:[#allocation2] sm:$0xff]
        %v827 = vld [vmem:[#allocation2 + $0x8] sm:$0xff]
        %v828 = vld [vmem:[#allocation2 + $0x10] sm:$0xff]
        %v829 = vld [vmem:[#allocation2 + $0x18] sm:$0xff]
        %v830 = vld [vmem:[#allocation2 + $0x20] sm:$0xff]
        %v831 = vld [vmem:[#allocation2 + $0x28] sm:$0xff]
        %v832 = vld [vmem:[#allocation2 + $0x30] sm:$0xff]
        %v833 = vld [vmem:[#allocation2 + $0x38] sm:$0xff]
        %v834 = vld [vmem:[#allocation2 + $0x40] sm:$0xff]
        %v835 = vld [vmem:[#allocation2 + $0x48] sm:$0xff]
        %v836 = vld [vmem:[#allocation2 + $0x50] sm:$0xff]
        %v837 = vld [vmem:[#allocation2 + $0x58] sm:$0xff]
        %v838 = vld [vmem:[#allocation2 + $0x60] sm:$0xff]
        %v839 = vld [vmem:[#allocation2 + $0x68] sm:$0xff]
        %v840 = vld [vmem:[#allocation2 + $0x70] sm:$0xff]
        %v841 = vld [vmem:[#allocation2 + $0x78] sm:$0xff]
        %842 = vadd.xlane.f32.xlu0 %v746
        %v843 = vpop.xlane.xlu0 %842
        %844 = vadd.xlane.f32.xlu0 %v747
        %v845 = vpop.xlane.xlu0 %844
        %846 = vadd.xlane.f32.xlu0 %v748
        %v847 = vpop.xlane.xlu0 %846
        %848 = vadd.xlane.f32.xlu0 %v749
        %v849 = vpop.xlane.xlu0 %848
        %850 = vadd.xlane.f32.xlu0 %v750
        %v851 = vpop.xlane.xlu0 %850
        %852 = vadd.xlane.f32.xlu0 %v751
        %v853 = vpop.xlane.xlu0 %852
        %854 = vadd.xlane.f32.xlu0 %v752
        %v855 = vpop.xlane.xlu0 %854
        %856 = vadd.xlane.f32.xlu0 %v753
        %v857 = vpop.xlane.xlu0 %856
        %858 = vadd.xlane.f32.xlu0 %v754
        %v859 = vpop.xlane.xlu0 %858
        %860 = vadd.xlane.f32.xlu0 %v755
        %v861 = vpop.xlane.xlu0 %860
        %862 = vadd.xlane.f32.xlu0 %v756
        %v863 = vpop.xlane.xlu0 %862
        %864 = vadd.xlane.f32.xlu0 %v757
        %v865 = vpop.xlane.xlu0 %864
        %866 = vadd.xlane.f32.xlu0 %v758
        %v867 = vpop.xlane.xlu0 %866
        %868 = vadd.xlane.f32.xlu0 %v759
        %v869 = vpop.xlane.xlu0 %868
        %870 = vadd.xlane.f32.xlu0 %v760
        %v871 = vpop.xlane.xlu0 %870
        %872 = vadd.xlane.f32.xlu0 %v761
        %v873 = vpop.xlane.xlu0 %872
        %v874 = vadd.f32 %v826, %v843
        %v875 = vadd.f32 %v827, %v845
        %v876 = vadd.f32 %v828, %v847
        %v877 = vadd.f32 %v829, %v849
        %v878 = vadd.f32 %v830, %v851
        %v879 = vadd.f32 %v831, %v853
        %v880 = vadd.f32 %v832, %v855
        %v881 = vadd.f32 %v833, %v857
        %v882 = vadd.f32 %v834, %v859
        %v883 = vadd.f32 %v835, %v861
        %v884 = vadd.f32 %v836, %v863
        %v885 = vadd.f32 %v837, %v865
        %v886 = vadd.f32 %v838, %v867
        %v887 = vadd.f32 %v839, %v869
        %v888 = vadd.f32 %v840, %v871
        %v889 = vadd.f32 %v841, %v873
        %vm890 = vcmask 7168
        %891 = vst.msk [vmem:[#allocation2] sm:$0xff] %vm890, %v874
        %892 = vst.msk [vmem:[#allocation2 + $0x8] sm:$0xff] %vm890, %v875
        %893 = vst.msk [vmem:[#allocation2 + $0x10] sm:$0xff] %vm890, %v876
        %894 = vst.msk [vmem:[#allocation2 + $0x18] sm:$0xff] %vm890, %v877
        %895 = vst.msk [vmem:[#allocation2 + $0x20] sm:$0xff] %vm890, %v878
        %896 = vst.msk [vmem:[#allocation2 + $0x28] sm:$0xff] %vm890, %v879
        %897 = vst.msk [vmem:[#allocation2 + $0x30] sm:$0xff] %vm890, %v880
        %898 = vst.msk [vmem:[#allocation2 + $0x38] sm:$0xff] %vm890, %v881
        %899 = vst.msk [vmem:[#allocation2 + $0x40] sm:$0xff] %vm890, %v882
        %900 = vst.msk [vmem:[#allocation2 + $0x48] sm:$0xff] %vm890, %v883
        %901 = vst.msk [vmem:[#allocation2 + $0x50] sm:$0xff] %vm890, %v884
        %902 = vst.msk [vmem:[#allocation2 + $0x58] sm:$0xff] %vm890, %v885
        %903 = vst.msk [vmem:[#allocation2 + $0x60] sm:$0xff] %vm890, %v886
        %904 = vst.msk [vmem:[#allocation2 + $0x68] sm:$0xff] %vm890, %v887
        %905 = vst.msk [vmem:[#allocation2 + $0x70] sm:$0xff] %vm890, %v888
        %906 = vst.msk [vmem:[#allocation2 + $0x78] sm:$0xff] %vm890, %v889
        %v907 = vld [vmem:[#allocation3] sm:$0xff]
        %v908 = vld [vmem:[#allocation3 + $0x8] sm:$0xff]
        %v909 = vld [vmem:[#allocation3 + $0x10] sm:$0xff]
        %v910 = vld [vmem:[#allocation3 + $0x18] sm:$0xff]
        %v911 = vld [vmem:[#allocation3 + $0x20] sm:$0xff]
        %v912 = vld [vmem:[#allocation3 + $0x28] sm:$0xff]
        %v913 = vld [vmem:[#allocation3 + $0x30] sm:$0xff]
        %v914 = vld [vmem:[#allocation3 + $0x38] sm:$0xff]
        %v915 = vld [vmem:[#allocation3 + $0x40] sm:$0xff]
        %v916 = vld [vmem:[#allocation3 + $0x48] sm:$0xff]
        %v917 = vld [vmem:[#allocation3 + $0x50] sm:$0xff]
        %v918 = vld [vmem:[#allocation3 + $0x58] sm:$0xff]
        %v919 = vld [vmem:[#allocation3 + $0x60] sm:$0xff]
        %v920 = vld [vmem:[#allocation3 + $0x68] sm:$0xff]
        %v921 = vld [vmem:[#allocation3 + $0x70] sm:$0xff]
        %v922 = vld [vmem:[#allocation3 + $0x78] sm:$0xff]
        %923 = vadd.xlane.f32.xlu0 %v810
        %v924 = vpop.xlane.xlu0 %923
        %925 = vadd.xlane.f32.xlu0 %v811
        %v926 = vpop.xlane.xlu0 %925
        %927 = vadd.xlane.f32.xlu0 %v812
        %v928 = vpop.xlane.xlu0 %927
        %929 = vadd.xlane.f32.xlu0 %v813
        %v930 = vpop.xlane.xlu0 %929
        %931 = vadd.xlane.f32.xlu0 %v814
        %v932 = vpop.xlane.xlu0 %931
        %933 = vadd.xlane.f32.xlu0 %v815
        %v934 = vpop.xlane.xlu0 %933
        %935 = vadd.xlane.f32.xlu0 %v816
        %v936 = vpop.xlane.xlu0 %935
        %937 = vadd.xlane.f32.xlu0 %v817
        %v938 = vpop.xlane.xlu0 %937
        %939 = vadd.xlane.f32.xlu0 %v818
        %v940 = vpop.xlane.xlu0 %939
        %941 = vadd.xlane.f32.xlu0 %v819
        %v942 = vpop.xlane.xlu0 %941
        %943 = vadd.xlane.f32.xlu0 %v820
        %v944 = vpop.xlane.xlu0 %943
        %945 = vadd.xlane.f32.xlu0 %v821
        %v946 = vpop.xlane.xlu0 %945
        %947 = vadd.xlane.f32.xlu0 %v822
        %v948 = vpop.xlane.xlu0 %947
        %949 = vadd.xlane.f32.xlu0 %v823
        %v950 = vpop.xlane.xlu0 %949
        %951 = vadd.xlane.f32.xlu0 %v824
        %v952 = vpop.xlane.xlu0 %951
        %953 = vadd.xlane.f32.xlu0 %v825
        %v954 = vpop.xlane.xlu0 %953
        %v955 = vadd.f32 %v907, %v924
        %v956 = vadd.f32 %v908, %v926
        %v957 = vadd.f32 %v909, %v928
        %v958 = vadd.f32 %v910, %v930
        %v959 = vadd.f32 %v911, %v932
        %v960 = vadd.f32 %v912, %v934
        %v961 = vadd.f32 %v913, %v936
        %v962 = vadd.f32 %v914, %v938
        %v963 = vadd.f32 %v915, %v940
        %v964 = vadd.f32 %v916, %v942
        %v965 = vadd.f32 %v917, %v944
        %v966 = vadd.f32 %v918, %v946
        %v967 = vadd.f32 %v919, %v948
        %v968 = vadd.f32 %v920, %v950
        %v969 = vadd.f32 %v921, %v952
        %v970 = vadd.f32 %v922, %v954
        %971 = vst.msk [vmem:[#allocation3] sm:$0xff] %vm890, %v955
        %972 = vst.msk [vmem:[#allocation3 + $0x8] sm:$0xff] %vm890, %v956
        %973 = vst.msk [vmem:[#allocation3 + $0x10] sm:$0xff] %vm890, %v957
        %974 = vst.msk [vmem:[#allocation3 + $0x18] sm:$0xff] %vm890, %v958
        %975 = vst.msk [vmem:[#allocation3 + $0x20] sm:$0xff] %vm890, %v959
        %976 = vst.msk [vmem:[#allocation3 + $0x28] sm:$0xff] %vm890, %v960
        %977 = vst.msk [vmem:[#allocation3 + $0x30] sm:$0xff] %vm890, %v961
        %978 = vst.msk [vmem:[#allocation3 + $0x38] sm:$0xff] %vm890, %v962
        %979 = vst.msk [vmem:[#allocation3 + $0x40] sm:$0xff] %vm890, %v963
        %980 = vst.msk [vmem:[#allocation3 + $0x48] sm:$0xff] %vm890, %v964
        %981 = vst.msk [vmem:[#allocation3 + $0x50] sm:$0xff] %vm890, %v965
        %982 = vst.msk [vmem:[#allocation3 + $0x58] sm:$0xff] %vm890, %v966
        %983 = vst.msk [vmem:[#allocation3 + $0x60] sm:$0xff] %vm890, %v967
        %984 = vst.msk [vmem:[#allocation3 + $0x68] sm:$0xff] %vm890, %v968
        %985 = vst.msk [vmem:[#allocation3 + $0x70] sm:$0xff] %vm890, %v969
        %986 = vst.msk [vmem:[#allocation3 + $0x78] sm:$0xff] %vm890, %v970
        %p987 = scmp.eq.s32.totalorder %s43, 1
        // Predicated region
        $region81: #{tpu_custom_call.1} parent=47 // pred_check
          %p988 = pneg %p987
        $region82: #{tpu_custom_call.1} parent=47 // pred_check_branch
          %990 = sbr.rel (%p988) target = $region84
        $region83: #{tpu_custom_call.1} parent=47 // pred_region
          %v991 = vld [vmem:[#allocation2] sm:$0xff]
          %v992 = vld [vmem:[#allocation2 + $0x8] sm:$0xff]
          %v993 = vld [vmem:[#allocation2 + $0x10] sm:$0xff]
          %v994 = vld [vmem:[#allocation2 + $0x18] sm:$0xff]
          %v995 = vld [vmem:[#allocation2 + $0x20] sm:$0xff]
          %v996 = vld [vmem:[#allocation2 + $0x28] sm:$0xff]
          %v997 = vld [vmem:[#allocation2 + $0x30] sm:$0xff]
          %v998 = vld [vmem:[#allocation2 + $0x38] sm:$0xff]
          %v999 = vld [vmem:[#allocation2 + $0x40] sm:$0xff]
          %v1000 = vld [vmem:[#allocation2 + $0x48] sm:$0xff]
          %v1001 = vld [vmem:[#allocation2 + $0x50] sm:$0xff]
          %v1002 = vld [vmem:[#allocation2 + $0x58] sm:$0xff]
          %v1003 = vld [vmem:[#allocation2 + $0x60] sm:$0xff]
          %v1004 = vld [vmem:[#allocation2 + $0x68] sm:$0xff]
          %v1005 = vld [vmem:[#allocation2 + $0x70] sm:$0xff]
          %v1006 = vld [vmem:[#allocation2 + $0x78] sm:$0xff]
          %v1007 = vadd.f32 %v991, 1.0
          %v1008 = vadd.f32 %v992, 1.0
          %v1009 = vadd.f32 %v993, 1.0
          %v1010 = vadd.f32 %v994, 1.0
          %v1011 = vadd.f32 %v995, 1.0
          %v1012 = vadd.f32 %v996, 1.0
          %v1013 = vadd.f32 %v997, 1.0
          %v1014 = vadd.f32 %v998, 1.0
          %v1015 = vadd.f32 %v999, 1.0
          %v1016 = vadd.f32 %v1000, 1.0
          %v1017 = vadd.f32 %v1001, 1.0
          %v1018 = vadd.f32 %v1002, 1.0
          %v1019 = vadd.f32 %v1003, 1.0
          %v1020 = vadd.f32 %v1004, 1.0
          %v1021 = vadd.f32 %v1005, 1.0
          %v1022 = vadd.f32 %v1006, 1.0
          %v1023 = vmax.f32 %v1007, 1e-12
          %v1024 = vmax.f32 %v1008, 1e-12
          %v1025 = vmax.f32 %v1009, 1e-12
          %v1026 = vmax.f32 %v1010, 1e-12
          %v1027 = vmax.f32 %v1011, 1e-12
          %v1028 = vmax.f32 %v1012, 1e-12
          %v1029 = vmax.f32 %v1013, 1e-12
          %v1030 = vmax.f32 %v1014, 1e-12
          %v1031 = vmax.f32 %v1015, 1e-12
          %v1032 = vmax.f32 %v1016, 1e-12
          %v1033 = vmax.f32 %v1017, 1e-12
          %v1034 = vmax.f32 %v1018, 1e-12
          %v1035 = vmax.f32 %v1019, 1e-12
          %v1036 = vmax.f32 %v1020, 1e-12
          %v1037 = vmax.f32 %v1021, 1e-12
          %v1038 = vmax.f32 %v1022, 1e-12
          %v1039 = vrsqrt.pop %v1023
          %v1040 = vrsqrt.pop %v1024
          %v1041 = vrsqrt.pop %v1025
          %v1042 = vrsqrt.pop %v1026
          %v1043 = vrsqrt.pop %v1027
          %v1044 = vrsqrt.pop %v1028
          %v1045 = vrsqrt.pop %v1029
          %v1046 = vrsqrt.pop %v1030
          %v1047 = vrsqrt.pop %v1031
          %v1048 = vrsqrt.pop %v1032
          %v1049 = vrsqrt.pop %v1033
          %v1050 = vrsqrt.pop %v1034
          %v1051 = vrsqrt.pop %v1035
          %v1052 = vrsqrt.pop %v1036
          %v1053 = vrsqrt.pop %v1037
          %v1054 = vrsqrt.pop %v1038
          %v1055 = vld [vmem:[#allocation3] sm:$0xff]
          %v1056 = vld [vmem:[#allocation3 + $0x8] sm:$0xff]
          %v1057 = vld [vmem:[#allocation3 + $0x10] sm:$0xff]
          %v1058 = vld [vmem:[#allocation3 + $0x18] sm:$0xff]
          %v1059 = vld [vmem:[#allocation3 + $0x20] sm:$0xff]
          %v1060 = vld [vmem:[#allocation3 + $0x28] sm:$0xff]
          %v1061 = vld [vmem:[#allocation3 + $0x30] sm:$0xff]
          %v1062 = vld [vmem:[#allocation3 + $0x38] sm:$0xff]
          %v1063 = vld [vmem:[#allocation3 + $0x40] sm:$0xff]
          %v1064 = vld [vmem:[#allocation3 + $0x48] sm:$0xff]
          %v1065 = vld [vmem:[#allocation3 + $0x50] sm:$0xff]
          %v1066 = vld [vmem:[#allocation3 + $0x58] sm:$0xff]
          %v1067 = vld [vmem:[#allocation3 + $0x60] sm:$0xff]
          %v1068 = vld [vmem:[#allocation3 + $0x68] sm:$0xff]
          %v1069 = vld [vmem:[#allocation3 + $0x70] sm:$0xff]
          %v1070 = vld [vmem:[#allocation3 + $0x78] sm:$0xff]
          %v1071 = vadd.f32 %v1055, 1.0
          %v1072 = vadd.f32 %v1056, 1.0
          %v1073 = vadd.f32 %v1057, 1.0
          %v1074 = vadd.f32 %v1058, 1.0
          %v1075 = vadd.f32 %v1059, 1.0
          %v1076 = vadd.f32 %v1060, 1.0
          %v1077 = vadd.f32 %v1061, 1.0
          %v1078 = vadd.f32 %v1062, 1.0
          %v1079 = vadd.f32 %v1063, 1.0
          %v1080 = vadd.f32 %v1064, 1.0
          %v1081 = vadd.f32 %v1065, 1.0
          %v1082 = vadd.f32 %v1066, 1.0
          %v1083 = vadd.f32 %v1067, 1.0
          %v1084 = vadd.f32 %v1068, 1.0
          %v1085 = vadd.f32 %v1069, 1.0
          %v1086 = vadd.f32 %v1070, 1.0
          %v1087 = vmax.f32 %v1071, 1e-12
          %v1088 = vmax.f32 %v1072, 1e-12
          %v1089 = vmax.f32 %v1073, 1e-12
          %v1090 = vmax.f32 %v1074, 1e-12
          %v1091 = vmax.f32 %v1075, 1e-12
          %v1092 = vmax.f32 %v1076, 1e-12
          %v1093 = vmax.f32 %v1077, 1e-12
          %v1094 = vmax.f32 %v1078, 1e-12
          %v1095 = vmax.f32 %v1079, 1e-12
          %v1096 = vmax.f32 %v1080, 1e-12
          %v1097 = vmax.f32 %v1081, 1e-12
          %v1098 = vmax.f32 %v1082, 1e-12
          %v1099 = vmax.f32 %v1083, 1e-12
          %v1100 = vmax.f32 %v1084, 1e-12
          %v1101 = vmax.f32 %v1085, 1e-12
          %v1102 = vmax.f32 %v1086, 1e-12
          %v1103 = vrsqrt.pop %v1087
          %v1104 = vrsqrt.pop %v1088
          %v1105 = vrsqrt.pop %v1089
          %v1106 = vrsqrt.pop %v1090
          %v1107 = vrsqrt.pop %v1091
          %v1108 = vrsqrt.pop %v1092
          %v1109 = vrsqrt.pop %v1093
          %v1110 = vrsqrt.pop %v1094
          %v1111 = vrsqrt.pop %v1095
          %v1112 = vrsqrt.pop %v1096
          %v1113 = vrsqrt.pop %v1097
          %v1114 = vrsqrt.pop %v1098
          %v1115 = vrsqrt.pop %v1099
          %v1116 = vrsqrt.pop %v1100
          %v1117 = vrsqrt.pop %v1101
          %v1118 = vrsqrt.pop %v1102
          %1119 = vst.msk [vmem:[%s619] sm:$0xff] %vm890, %v1039
          %1120 = vst.msk [vmem:[%s619 + $0x8] sm:$0xff] %vm890, %v1040
          %1121 = vst.msk [vmem:[%s619 + $0x10] sm:$0xff] %vm890, %v1041
          %1122 = vst.msk [vmem:[%s619 + $0x18] sm:$0xff] %vm890, %v1042
          %1123 = vst.msk [vmem:[%s619 + $0x20] sm:$0xff] %vm890, %v1043
          %1124 = vst.msk [vmem:[%s619 + $0x28] sm:$0xff] %vm890, %v1044
          %1125 = vst.msk [vmem:[%s619 + $0x30] sm:$0xff] %vm890, %v1045
          %1126 = vst.msk [vmem:[%s619 + $0x38] sm:$0xff] %vm890, %v1046
          %1127 = vst.msk [vmem:[%s619 + $0x40] sm:$0xff] %vm890, %v1047
          %1128 = vst.msk [vmem:[%s619 + $0x48] sm:$0xff] %vm890, %v1048
          %1129 = vst.msk [vmem:[%s619 + $0x50] sm:$0xff] %vm890, %v1049
          %1130 = vst.msk [vmem:[%s619 + $0x58] sm:$0xff] %vm890, %v1050
          %1131 = vst.msk [vmem:[%s619 + $0x60] sm:$0xff] %vm890, %v1051
          %1132 = vst.msk [vmem:[%s619 + $0x68] sm:$0xff] %vm890, %v1052
          %1133 = vst.msk [vmem:[%s619 + $0x70] sm:$0xff] %vm890, %v1053
          %1134 = vst.msk [vmem:[%s619 + $0x78] sm:$0xff] %vm890, %v1054
          %1135 = vst.msk [vmem:[%s625] sm:$0xff] %vm890, %v1103
          %1136 = vst.msk [vmem:[%s625 + $0x8] sm:$0xff] %vm890, %v1104
          %1137 = vst.msk [vmem:[%s625 + $0x10] sm:$0xff] %vm890, %v1105
          %1138 = vst.msk [vmem:[%s625 + $0x18] sm:$0xff] %vm890, %v1106
          %1139 = vst.msk [vmem:[%s625 + $0x20] sm:$0xff] %vm890, %v1107
          %1140 = vst.msk [vmem:[%s625 + $0x28] sm:$0xff] %vm890, %v1108
          %1141 = vst.msk [vmem:[%s625 + $0x30] sm:$0xff] %vm890, %v1109
          %1142 = vst.msk [vmem:[%s625 + $0x38] sm:$0xff] %vm890, %v1110
          %1143 = vst.msk [vmem:[%s625 + $0x40] sm:$0xff] %vm890, %v1111
          %1144 = vst.msk [vmem:[%s625 + $0x48] sm:$0xff] %vm890, %v1112
          %1145 = vst.msk [vmem:[%s625 + $0x50] sm:$0xff] %vm890, %v1113
          %1146 = vst.msk [vmem:[%s625 + $0x58] sm:$0xff] %vm890, %v1114
          %1147 = vst.msk [vmem:[%s625 + $0x60] sm:$0xff] %vm890, %v1115
          %1148 = vst.msk [vmem:[%s625 + $0x68] sm:$0xff] %vm890, %v1116
          %1149 = vst.msk [vmem:[%s625 + $0x70] sm:$0xff] %vm890, %v1117
          %1150 = vst.msk [vmem:[%s625 + $0x78] sm:$0xff] %vm890, %v1118
          %v1151 = vld [vmem:[%s521] sm:$0xff]
          %v1152 = vld [vmem:[%s521 + $0x8] sm:$0xff]
          %v1153 = vld [vmem:[%s521 + $0x10] sm:$0xff]
          %v1154 = vld [vmem:[%s521 + $0x18] sm:$0xff]
          %v1155 = vld [vmem:[%s521 + $0x20] sm:$0xff]
          %v1156 = vld [vmem:[%s521 + $0x28] sm:$0xff]
          %v1157 = vld [vmem:[%s521 + $0x30] sm:$0xff]
          %v1158 = vld [vmem:[%s521 + $0x38] sm:$0xff]
          %v1159 = vld [vmem:[%s521 + $0x40] sm:$0xff]
          %v1160 = vld [vmem:[%s521 + $0x48] sm:$0xff]
          %v1161 = vld [vmem:[%s521 + $0x50] sm:$0xff]
          %v1162 = vld [vmem:[%s521 + $0x58] sm:$0xff]
          %v1163 = vld [vmem:[%s521 + $0x60] sm:$0xff]
          %v1164 = vld [vmem:[%s521 + $0x68] sm:$0xff]
          %v1165 = vld [vmem:[%s521 + $0x70] sm:$0xff]
          %v1166 = vld [vmem:[%s521 + $0x78] sm:$0xff]
          %v1167 = vld [vmem:[%s530] sm:$0xff]
          %v1168 = vld [vmem:[%s530 + $0x8] sm:$0xff]
          %v1169 = vld [vmem:[%s530 + $0x10] sm:$0xff]
          %v1170 = vld [vmem:[%s530 + $0x18] sm:$0xff]
          %v1171 = vld [vmem:[%s530 + $0x20] sm:$0xff]
          %v1172 = vld [vmem:[%s530 + $0x28] sm:$0xff]
          %v1173 = vld [vmem:[%s530 + $0x30] sm:$0xff]
          %v1174 = vld [vmem:[%s530 + $0x38] sm:$0xff]
          %v1175 = vld [vmem:[%s530 + $0x40] sm:$0xff]
          %v1176 = vld [vmem:[%s530 + $0x48] sm:$0xff]
          %v1177 = vld [vmem:[%s530 + $0x50] sm:$0xff]
          %v1178 = vld [vmem:[%s530 + $0x58] sm:$0xff]
          %v1179 = vld [vmem:[%s530 + $0x60] sm:$0xff]
          %v1180 = vld [vmem:[%s530 + $0x68] sm:$0xff]
          %v1181 = vld [vmem:[%s530 + $0x70] sm:$0xff]
          %v1182 = vld [vmem:[%s530 + $0x78] sm:$0xff]
          %v1183 = vadd.f32 %v1151, %v1167
          %v1184 = vadd.f32 %v1152, %v1168
          %v1185 = vadd.f32 %v1153, %v1169
          %v1186 = vadd.f32 %v1154, %v1170
          %v1187 = vadd.f32 %v1155, %v1171
          %v1188 = vadd.f32 %v1156, %v1172
          %v1189 = vadd.f32 %v1157, %v1173
          %v1190 = vadd.f32 %v1158, %v1174
          %v1191 = vadd.f32 %v1159, %v1175
          %v1192 = vadd.f32 %v1160, %v1176
          %v1193 = vadd.f32 %v1161, %v1177
          %v1194 = vadd.f32 %v1162, %v1178
          %v1195 = vadd.f32 %v1163, %v1179
          %v1196 = vadd.f32 %v1164, %v1180
          %v1197 = vadd.f32 %v1165, %v1181
          %v1198 = vadd.f32 %v1166, %v1182
          %v1199 = vld [vmem:[#allocation13] sm:$0xff]
          %v1200 = vld [vmem:[#allocation13 + $0x8] sm:$0xff]
          %v1201 = vld [vmem:[#allocation13 + $0x10] sm:$0xff]
          %v1202 = vld [vmem:[#allocation13 + $0x18] sm:$0xff]
          %v1203 = vld [vmem:[#allocation13 + $0x20] sm:$0xff]
          %v1204 = vld [vmem:[#allocation13 + $0x28] sm:$0xff]
          %v1205 = vld [vmem:[#allocation13 + $0x30] sm:$0xff]
          %v1206 = vld [vmem:[#allocation13 + $0x38] sm:$0xff]
          %v1207 = vld [vmem:[#allocation13 + $0x40] sm:$0xff]
          %v1208 = vld [vmem:[#allocation13 + $0x48] sm:$0xff]
          %v1209 = vld [vmem:[#allocation13 + $0x50] sm:$0xff]
          %v1210 = vld [vmem:[#allocation13 + $0x58] sm:$0xff]
          %v1211 = vld [vmem:[#allocation13 + $0x60] sm:$0xff]
          %v1212 = vld [vmem:[#allocation13 + $0x68] sm:$0xff]
          %v1213 = vld [vmem:[#allocation13 + $0x70] sm:$0xff]
          %v1214 = vld [vmem:[#allocation13 + $0x78] sm:$0xff]
          %1215 = vmatprep.subr.mxu0 0.0
          %1216 = vmatpush1.msra.mxu0 %v1199
          %1217 = vmatprep.subr.mxu0 0.0
          %1218 = vmatpush1.msra.mxu0 %v1200
          %1219 = vmatprep.subr.mxu0 0.0
          %1220 = vmatpush1.msra.mxu0 %v1201
          %1221 = vmatprep.subr.mxu0 0.0
          %1222 = vmatpush1.msra.mxu0 %v1202
          %1223 = vmatprep.subr.mxu0 0.0
          %1224 = vmatpush1.msra.mxu0 %v1203
          %1225 = vmatprep.subr.mxu0 0.0
          %1226 = vmatpush1.msra.mxu0 %v1204
          %1227 = vmatprep.subr.mxu0 0.0
          %1228 = vmatpush1.msra.mxu0 %v1205
          %1229 = vmatprep.subr.mxu0 0.0
          %1230 = vmatpush1.msra.mxu0 %v1206
          %1231 = vmatprep.subr.mxu0 0.0
          %1232 = vmatpush1.msra.mxu0 %v1207
          %1233 = vmatprep.subr.mxu0 0.0
          %1234 = vmatpush1.msra.mxu0 %v1208
          %1235 = vmatprep.subr.mxu0 0.0
          %1236 = vmatpush1.msra.mxu0 %v1209
          %1237 = vmatprep.subr.mxu0 0.0
          %1238 = vmatpush1.msra.mxu0 %v1210
          %1239 = vmatprep.subr.mxu0 0.0
          %1240 = vmatpush1.msra.mxu0 %v1211
          %1241 = vmatprep.subr.mxu0 0.0
          %1242 = vmatpush1.msra.mxu0 %v1212
          %1243 = vmatprep.subr.mxu0 0.0
          %1244 = vmatpush1.msra.mxu0 %v1213
          %1245 = vmatprep.subr.mxu0 0.0
          %1246 = vmatpush1.msra.mxu0 %v1214
          %1247 = vmatprep.subr.mxu0 0.0
          %1248 = vmatpush1.msra.mxu0 0.0
          %1249 = vmatprep.subr.mxu0 0.0
          %1250 = vmatpush1.msra.mxu0 0.0
          %1251 = vmatprep.subr.mxu0 0.0
          %1252 = vmatpush1.msra.mxu0 0.0
          %1253 = vmatprep.subr.mxu0 0.0
          %1254 = vmatpush1.msra.mxu0 0.0
          %1255 = vmatprep.subr.mxu0 0.0
          %1256 = vmatpush1.msra.mxu0 0.0
          %1257 = vmatprep.subr.mxu0 0.0
          %1258 = vmatpush1.msra.mxu0 0.0
          %1259 = vmatprep.subr.mxu0 0.0
          %1260 = vmatpush1.msra.mxu0 0.0
          %1261 = vmatprep.subr.mxu0 0.0
          %1262 = vmatpush1.msra.mxu0 0.0
          %1263 = vmatprep.subr.mxu0 0.0
          %1264 = vmatpush1.msra.mxu0 0.0
          %1265 = vmatprep.subr.mxu0 0.0
          %1266 = vmatpush1.msra.mxu0 0.0
          %1267 = vmatprep.subr.mxu0 0.0
          %1268 = vmatpush1.msra.mxu0 0.0
          %1269 = vmatprep.subr.mxu0 0.0
          %1270 = vmatpush1.msra.mxu0 0.0
          %1271 = vmatprep.subr.mxu0 0.0
          %1272 = vmatpush1.msra.mxu0 0.0
          %1273 = vmatprep.subr.mxu0 0.0
          %1274 = vmatpush1.msra.mxu0 0.0
          %1275 = vmatprep.subr.mxu0 0.0
          %1276 = vmatpush1.msra.mxu0 0.0
          %1277 = vmatprep.subr.mxu0 0.0
          %1278 = vmatpush1.msra.mxu0 0.0
          %1279 = vmatprep.mubr.f32.mxu0 0.0
          %1280 = vmatmul.mubr.f32.gmra.mrb[0].mxu0 %v1183
          %v1281 = vpop.f32.mrb[0].mxu0
          %v1282 = vadd.f32 0.0, %v1281
          %v1283 = vpop.f32.mrb[0].mxu0
          %1284 = vmatprep.mubr.f32.mxu0 0.0
          %1285 = vmatmul.mubr.f32.gmra.mrb[0].mxu0 %v1184
          %v1286 = vpop.f32.mrb[0].mxu0
          %v1287 = vadd.f32 0.0, %v1286
          %v1288 = vpop.f32.mrb[0].mxu0
          %1289 = vmatprep.mubr.f32.mxu0 0.0
          %1290 = vmatmul.mubr.f32.gmra.mrb[0].mxu0 %v1185
          %v1291 = vpop.f32.mrb[0].mxu0
          %v1292 = vadd.f32 0.0, %v1291
          %v1293 = vpop.f32.mrb[0].mxu0
          %1294 = vmatprep.mubr.f32.mxu0 0.0
          %1295 = vmatmul.mubr.f32.gmra.mrb[0].mxu0 %v1186
          %v1296 = vpop.f32.mrb[0].mxu0
          %v1297 = vadd.f32 0.0, %v1296
          %v1298 = vpop.f32.mrb[0].mxu0
          %1299 = vmatprep.mubr.f32.mxu0 0.0
          %1300 = vmatmul.mubr.f32.gmra.mrb[0].mxu0 %v1187
          %v1301 = vpop.f32.mrb[0].mxu0
          %v1302 = vadd.f32 0.0, %v1301
          %v1303 = vpop.f32.mrb[0].mxu0
          %1304 = vmatprep.mubr.f32.mxu0 0.0
          %1305 = vmatmul.mubr.f32.gmra.mrb[0].mxu0 %v1188
          %v1306 = vpop.f32.mrb[0].mxu0
          %v1307 = vadd.f32 0.0, %v1306
          %v1308 = vpop.f32.mrb[0].mxu0
          %1309 = vmatprep.mubr.f32.mxu0 0.0
          %1310 = vmatmul.mubr.f32.gmra.mrb[0].mxu0 %v1189
          %v1311 = vpop.f32.mrb[0].mxu0
          %v1312 = vadd.f32 0.0, %v1311
          %v1313 = vpop.f32.mrb[0].mxu0
          %1314 = vmatprep.mubr.f32.mxu0 0.0
          %1315 = vmatmul.mubr.f32.gmra.mrb[0].mxu0 %v1190
          %v1316 = vpop.f32.mrb[0].mxu0
          %v1317 = vadd.f32 0.0, %v1316
          %v1318 = vpop.f32.mrb[0].mxu0
          %1319 = vmatprep.mubr.f32.mxu0 0.0
          %1320 = vmatmul.mubr.f32.gmra.mrb[0].mxu0 %v1191
          %v1321 = vpop.f32.mrb[0].mxu0
          %v1322 = vadd.f32 0.0, %v1321
          %v1323 = vpop.f32.mrb[0].mxu0
          %1324 = vmatprep.mubr.f32.mxu0 0.0
          %1325 = vmatmul.mubr.f32.gmra.mrb[0].mxu0 %v1192
          %v1326 = vpop.f32.mrb[0].mxu0
          %v1327 = vadd.f32 0.0, %v1326
          %v1328 = vpop.f32.mrb[0].mxu0
          %1329 = vmatprep.mubr.f32.mxu0 0.0
          %1330 = vmatmul.mubr.f32.gmra.mrb[0].mxu0 %v1193
          %v1331 = vpop.f32.mrb[0].mxu0
          %v1332 = vadd.f32 0.0, %v1331
          %v1333 = vpop.f32.mrb[0].mxu0
          %1334 = vmatprep.mubr.f32.mxu0 0.0
          %1335 = vmatmul.mubr.f32.gmra.mrb[0].mxu0 %v1194
          %v1336 = vpop.f32.mrb[0].mxu0
          %v1337 = vadd.f32 0.0, %v1336
          %v1338 = vpop.f32.mrb[0].mxu0
          %1339 = vmatprep.mubr.f32.mxu0 0.0
          %1340 = vmatmul.mubr.f32.gmra.mrb[0].mxu0 %v1195
          %v1341 = vpop.f32.mrb[0].mxu0
          %v1342 = vadd.f32 0.0, %v1341
          %v1343 = vpop.f32.mrb[0].mxu0
          %1344 = vmatprep.mubr.f32.mxu0 0.0
          %1345 = vmatmul.mubr.f32.gmra.mrb[0].mxu0 %v1196
          %v1346 = vpop.f32.mrb[0].mxu0
          %v1347 = vadd.f32 0.0, %v1346
          %v1348 = vpop.f32.mrb[0].mxu0
          %1349 = vmatprep.mubr.f32.mxu0 0.0
          %1350 = vmatmul.mubr.f32.gmra.mrb[0].mxu0 %v1197
          %v1351 = vpop.f32.mrb[0].mxu0
          %v1352 = vadd.f32 0.0, %v1351
          %v1353 = vpop.f32.mrb[0].mxu0
          %1354 = vmatprep.mubr.f32.mxu0 0.0
          %1355 = vmatmul.mubr.f32.gmra.mrb[0].mxu0 %v1198
          %v1356 = vpop.f32.mrb[0].mxu0
          %v1357 = vadd.f32 0.0, %v1356
          %v1358 = vpop.f32.mrb[0].mxu0
          %1359 = vdwg.mxu0
          %1361 = vset.pattern.permute.xlu0 0
          %1362 = vperm.xlu0 %1361, %v1039
          %v1363 = vpop.permute.xlu0 %1362
          %1366 = vset.pattern.permute.xlu0 0
          %1367 = vperm.xlu0 %1366, %v1040
          %v1368 = vpop.permute.xlu0 %1367
          %1371 = vset.pattern.permute.xlu0 0
          %1372 = vperm.xlu0 %1371, %v1041
          %v1373 = vpop.permute.xlu0 %1372
          %1376 = vset.pattern.permute.xlu0 0
          %1377 = vperm.xlu0 %1376, %v1042
          %v1378 = vpop.permute.xlu0 %1377
          %1381 = vset.pattern.permute.xlu0 0
          %1382 = vperm.xlu0 %1381, %v1043
          %v1383 = vpop.permute.xlu0 %1382
          %1386 = vset.pattern.permute.xlu0 0
          %1387 = vperm.xlu0 %1386, %v1044
          %v1388 = vpop.permute.xlu0 %1387
          %1391 = vset.pattern.permute.xlu0 0
          %1392 = vperm.xlu0 %1391, %v1045
          %v1393 = vpop.permute.xlu0 %1392
          %1396 = vset.pattern.permute.xlu0 0
          %1397 = vperm.xlu0 %1396, %v1046
          %v1398 = vpop.permute.xlu0 %1397
          %1401 = vset.pattern.permute.xlu0 0
          %1402 = vperm.xlu0 %1401, %v1047
          %v1403 = vpop.permute.xlu0 %1402
          %1406 = vset.pattern.permute.xlu0 0
          %1407 = vperm.xlu0 %1406, %v1048
          %v1408 = vpop.permute.xlu0 %1407
          %1411 = vset.pattern.permute.xlu0 0
          %1412 = vperm.xlu0 %1411, %v1049
          %v1413 = vpop.permute.xlu0 %1412
          %1416 = vset.pattern.permute.xlu0 0
          %1417 = vperm.xlu0 %1416, %v1050
          %v1418 = vpop.permute.xlu0 %1417
          %1421 = vset.pattern.permute.xlu0 0
          %1422 = vperm.xlu0 %1421, %v1051
          %v1423 = vpop.permute.xlu0 %1422
          %1426 = vset.pattern.permute.xlu0 0
          %1427 = vperm.xlu0 %1426, %v1052
          %v1428 = vpop.permute.xlu0 %1427
          %1431 = vset.pattern.permute.xlu0 0
          %1432 = vperm.xlu0 %1431, %v1053
          %v1433 = vpop.permute.xlu0 %1432
          %1436 = vset.pattern.permute.xlu0 0
          %1437 = vperm.xlu0 %1436, %v1054
          %v1438 = vpop.permute.xlu0 %1437
          %v1440 = vmul.f32 %v1363, %v1282
          %v1441 = vmul.f32 %v1368, %v1287
          %v1442 = vmul.f32 %v1373, %v1292
          %v1443 = vmul.f32 %v1378, %v1297
          %v1444 = vmul.f32 %v1383, %v1302
          %v1445 = vmul.f32 %v1388, %v1307
          %v1446 = vmul.f32 %v1393, %v1312
          %v1447 = vmul.f32 %v1398, %v1317
          %v1448 = vmul.f32 %v1403, %v1322
          %v1449 = vmul.f32 %v1408, %v1327
          %v1450 = vmul.f32 %v1413, %v1332
          %v1451 = vmul.f32 %v1418, %v1337
          %v1452 = vmul.f32 %v1423, %v1342
          %v1453 = vmul.f32 %v1428, %v1347
          %v1454 = vmul.f32 %v1433, %v1352
          %v1455 = vmul.f32 %v1438, %v1357
          %1456 = vst [vmem:[%s602] sm:$0xff] %v1440
          %1457 = vst [vmem:[%s602 + $0x8] sm:$0xff] %v1441
          %1458 = vst [vmem:[%s602 + $0x10] sm:$0xff] %v1442
          %1459 = vst [vmem:[%s602 + $0x18] sm:$0xff] %v1443
          %1460 = vst [vmem:[%s602 + $0x20] sm:$0xff] %v1444
          %1461 = vst [vmem:[%s602 + $0x28] sm:$0xff] %v1445
          %1462 = vst [vmem:[%s602 + $0x30] sm:$0xff] %v1446
          %1463 = vst [vmem:[%s602 + $0x38] sm:$0xff] %v1447
          %1464 = vst [vmem:[%s602 + $0x40] sm:$0xff] %v1448
          %1465 = vst [vmem:[%s602 + $0x48] sm:$0xff] %v1449
          %1466 = vst [vmem:[%s602 + $0x50] sm:$0xff] %v1450
          %1467 = vst [vmem:[%s602 + $0x58] sm:$0xff] %v1451
          %1468 = vst [vmem:[%s602 + $0x60] sm:$0xff] %v1452
          %1469 = vst [vmem:[%s602 + $0x68] sm:$0xff] %v1453
          %1470 = vst [vmem:[%s602 + $0x70] sm:$0xff] %v1454
          %1471 = vst [vmem:[%s602 + $0x78] sm:$0xff] %v1455
          %v1472 = vld [vmem:[#allocation15] sm:$0xff]
          %v1473 = vld [vmem:[#allocation15 + $0x8] sm:$0xff]
          %v1474 = vld [vmem:[#allocation15 + $0x10] sm:$0xff]
          %v1475 = vld [vmem:[#allocation15 + $0x18] sm:$0xff]
          %v1476 = vld [vmem:[#allocation15 + $0x20] sm:$0xff]
          %v1477 = vld [vmem:[#allocation15 + $0x28] sm:$0xff]
          %v1478 = vld [vmem:[#allocation15 + $0x30] sm:$0xff]
          %v1479 = vld [vmem:[#allocation15 + $0x38] sm:$0xff]
          %v1480 = vld [vmem:[#allocation15 + $0x40] sm:$0xff]
          %v1481 = vld [vmem:[#allocation15 + $0x48] sm:$0xff]
          %v1482 = vld [vmem:[#allocation15 + $0x50] sm:$0xff]
          %v1483 = vld [vmem:[#allocation15 + $0x58] sm:$0xff]
          %v1484 = vld [vmem:[#allocation15 + $0x60] sm:$0xff]
          %v1485 = vld [vmem:[#allocation15 + $0x68] sm:$0xff]
          %v1486 = vld [vmem:[#allocation15 + $0x70] sm:$0xff]
          %v1487 = vld [vmem:[#allocation15 + $0x78] sm:$0xff]
          %1488 = vmatprep.subr.mxu0 0.0
          %1489 = vmatpush1.msra.mxu0 %v1472
          %1490 = vmatprep.subr.mxu0 0.0
          %1491 = vmatpush1.msra.mxu0 %v1473
          %1492 = vmatprep.subr.mxu0 0.0
          %1493 = vmatpush1.msra.mxu0 %v1474
          %1494 = vmatprep.subr.mxu0 0.0
          %1495 = vmatpush1.msra.mxu0 %v1475
          %1496 = vmatprep.subr.mxu0 0.0
          %1497 = vmatpush1.msra.mxu0 %v1476
          %1498 = vmatprep.subr.mxu0 0.0
          %1499 = vmatpush1.msra.mxu0 %v1477
          %1500 = vmatprep.subr.mxu0 0.0
          %1501 = vmatpush1.msra.mxu0 %v1478
          %1502 = vmatprep.subr.mxu0 0.0
          %1503 = vmatpush1.msra.mxu0 %v1479
          %1504 = vmatprep.subr.mxu0 0.0
          %1505 = vmatpush1.msra.mxu0 %v1480
          %1506 = vmatprep.subr.mxu0 0.0
          %1507 = vmatpush1.msra.mxu0 %v1481
          %1508 = vmatprep.subr.mxu0 0.0
          %1509 = vmatpush1.msra.mxu0 %v1482
          %1510 = vmatprep.subr.mxu0 0.0
          %1511 = vmatpush1.msra.mxu0 %v1483
          %1512 = vmatprep.subr.mxu0 0.0
          %1513 = vmatpush1.msra.mxu0 %v1484
          %1514 = vmatprep.subr.mxu0 0.0
          %1515 = vmatpush1.msra.mxu0 %v1485
          %1516 = vmatprep.subr.mxu0 0.0
          %1517 = vmatpush1.msra.mxu0 %v1486
          %1518 = vmatprep.subr.mxu0 0.0
          %1519 = vmatpush1.msra.mxu0 %v1487
          %1520 = vmatprep.subr.mxu0 0.0
          %1521 = vmatpush1.msra.mxu0 0.0
          %1522 = vmatprep.subr.mxu0 0.0
          %1523 = vmatpush1.msra.mxu0 0.0
          %1524 = vmatprep.subr.mxu0 0.0
          %1525 = vmatpush1.msra.mxu0 0.0
          %1526 = vmatprep.subr.mxu0 0.0
          %1527 = vmatpush1.msra.mxu0 0.0
          %1528 = vmatprep.subr.mxu0 0.0
          %1529 = vmatpush1.msra.mxu0 0.0
          %1530 = vmatprep.subr.mxu0 0.0
          %1531 = vmatpush1.msra.mxu0 0.0
          %1532 = vmatprep.subr.mxu0 0.0
          %1533 = vmatpush1.msra.mxu0 0.0
          %1534 = vmatprep.subr.mxu0 0.0
          %1535 = vmatpush1.msra.mxu0 0.0
          %1536 = vmatprep.subr.mxu0 0.0
          %1537 = vmatpush1.msra.mxu0 0.0
          %1538 = vmatprep.subr.mxu0 0.0
          %1539 = vmatpush1.msra.mxu0 0.0
          %1540 = vmatprep.subr.mxu0 0.0
          %1541 = vmatpush1.msra.mxu0 0.0
          %1542 = vmatprep.subr.mxu0 0.0
          %1543 = vmatpush1.msra.mxu0 0.0
          %1544 = vmatprep.subr.mxu0 0.0
          %1545 = vmatpush1.msra.mxu0 0.0
          %1546 = vmatprep.subr.mxu0 0.0
          %1547 = vmatpush1.msra.mxu0 0.0
          %1548 = vmatprep.subr.mxu0 0.0
          %1549 = vmatpush1.msra.mxu0 0.0
          %1550 = vmatprep.subr.mxu0 0.0
          %1551 = vmatpush1.msra.mxu0 0.0
          %1552 = vmatprep.mubr.f32.mxu0 0.0
          %1553 = vmatmul.mubr.f32.gmra.mrb[0].mxu0 %v1151
          %v1554 = vpop.f32.mrb[0].mxu0
          %v1555 = vadd.f32 0.0, %v1554
          %v1556 = vpop.f32.mrb[0].mxu0
          %1557 = vmatprep.mubr.f32.mxu0 0.0
          %1558 = vmatmul.mubr.f32.gmra.mrb[0].mxu0 %v1152
          %v1559 = vpop.f32.mrb[0].mxu0
          %v1560 = vadd.f32 0.0, %v1559
          %v1561 = vpop.f32.mrb[0].mxu0
          %1562 = vmatprep.mubr.f32.mxu0 0.0
          %1563 = vmatmul.mubr.f32.gmra.mrb[0].mxu0 %v1153
          %v1564 = vpop.f32.mrb[0].mxu0
          %v1565 = vadd.f32 0.0, %v1564
          %v1566 = vpop.f32.mrb[0].mxu0
          %1567 = vmatprep.mubr.f32.mxu0 0.0
          %1568 = vmatmul.mubr.f32.gmra.mrb[0].mxu0 %v1154
          %v1569 = vpop.f32.mrb[0].mxu0
          %v1570 = vadd.f32 0.0, %v1569
          %v1571 = vpop.f32.mrb[0].mxu0
          %1572 = vmatprep.mubr.f32.mxu0 0.0
          %1573 = vmatmul.mubr.f32.gmra.mrb[0].mxu0 %v1155
          %v1574 = vpop.f32.mrb[0].mxu0
          %v1575 = vadd.f32 0.0, %v1574
          %v1576 = vpop.f32.mrb[0].mxu0
          %1577 = vmatprep.mubr.f32.mxu0 0.0
          %1578 = vmatmul.mubr.f32.gmra.mrb[0].mxu0 %v1156
          %v1579 = vpop.f32.mrb[0].mxu0
          %v1580 = vadd.f32 0.0, %v1579
          %v1581 = vpop.f32.mrb[0].mxu0
          %1582 = vmatprep.mubr.f32.mxu0 0.0
          %1583 = vmatmul.mubr.f32.gmra.mrb[0].mxu0 %v1157
          %v1584 = vpop.f32.mrb[0].mxu0
          %v1585 = vadd.f32 0.0, %v1584
          %v1586 = vpop.f32.mrb[0].mxu0
          %1587 = vmatprep.mubr.f32.mxu0 0.0
          %1588 = vmatmul.mubr.f32.gmra.mrb[0].mxu0 %v1158
          %v1589 = vpop.f32.mrb[0].mxu0
          %v1590 = vadd.f32 0.0, %v1589
          %v1591 = vpop.f32.mrb[0].mxu0
          %1592 = vmatprep.mubr.f32.mxu0 0.0
          %1593 = vmatmul.mubr.f32.gmra.mrb[0].mxu0 %v1159
          %v1594 = vpop.f32.mrb[0].mxu0
          %v1595 = vadd.f32 0.0, %v1594
          %v1596 = vpop.f32.mrb[0].mxu0
          %1597 = vmatprep.mubr.f32.mxu0 0.0
          %1598 = vmatmul.mubr.f32.gmra.mrb[0].mxu0 %v1160
          %v1599 = vpop.f32.mrb[0].mxu0
          %v1600 = vadd.f32 0.0, %v1599
          %v1601 = vpop.f32.mrb[0].mxu0
          %1602 = vmatprep.mubr.f32.mxu0 0.0
          %1603 = vmatmul.mubr.f32.gmra.mrb[0].mxu0 %v1161
          %v1604 = vpop.f32.mrb[0].mxu0
          %v1605 = vadd.f32 0.0, %v1604
          %v1606 = vpop.f32.mrb[0].mxu0
          %1607 = vmatprep.mubr.f32.mxu0 0.0
          %1608 = vmatmul.mubr.f32.gmra.mrb[0].mxu0 %v1162
          %v1609 = vpop.f32.mrb[0].mxu0
          %v1610 = vadd.f32 0.0, %v1609
          %v1611 = vpop.f32.mrb[0].mxu0
          %1612 = vmatprep.mubr.f32.mxu0 0.0
          %1613 = vmatmul.mubr.f32.gmra.mrb[0].mxu0 %v1163
          %v1614 = vpop.f32.mrb[0].mxu0
          %v1615 = vadd.f32 0.0, %v1614
          %v1616 = vpop.f32.mrb[0].mxu0
          %1617 = vmatprep.mubr.f32.mxu0 0.0
          %1618 = vmatmul.mubr.f32.gmra.mrb[0].mxu0 %v1164
          %v1619 = vpop.f32.mrb[0].mxu0
          %v1620 = vadd.f32 0.0, %v1619
          %v1621 = vpop.f32.mrb[0].mxu0
          %1622 = vmatprep.mubr.f32.mxu0 0.0
          %1623 = vmatmul.mubr.f32.gmra.mrb[0].mxu0 %v1165
          %v1624 = vpop.f32.mrb[0].mxu0
          %v1625 = vadd.f32 0.0, %v1624
          %v1626 = vpop.f32.mrb[0].mxu0
          %1627 = vmatprep.mubr.f32.mxu0 0.0
          %1628 = vmatmul.mubr.f32.gmra.mrb[0].mxu0 %v1166
          %v1629 = vpop.f32.mrb[0].mxu0
          %v1630 = vadd.f32 0.0, %v1629
          %v1631 = vpop.f32.mrb[0].mxu0
          %1632 = vdwg.mxu0
          %1634 = vset.pattern.permute.xlu0 0
          %1635 = vperm.xlu0 %1634, %v1103
          %v1636 = vpop.permute.xlu0 %1635
          %1639 = vset.pattern.permute.xlu0 0
          %1640 = vperm.xlu0 %1639, %v1104
          %v1641 = vpop.permute.xlu0 %1640
          %1644 = vset.pattern.permute.xlu0 0
          %1645 = vperm.xlu0 %1644, %v1105
          %v1646 = vpop.permute.xlu0 %1645
          %1649 = vset.pattern.permute.xlu0 0
          %1650 = vperm.xlu0 %1649, %v1106
          %v1651 = vpop.permute.xlu0 %1650
          %1654 = vset.pattern.permute.xlu0 0
          %1655 = vperm.xlu0 %1654, %v1107
          %v1656 = vpop.permute.xlu0 %1655
          %1659 = vset.pattern.permute.xlu0 0
          %1660 = vperm.xlu0 %1659, %v1108
          %v1661 = vpop.permute.xlu0 %1660
          %1664 = vset.pattern.permute.xlu0 0
          %1665 = vperm.xlu0 %1664, %v1109
          %v1666 = vpop.permute.xlu0 %1665
          %1669 = vset.pattern.permute.xlu0 0
          %1670 = vperm.xlu0 %1669, %v1110
          %v1671 = vpop.permute.xlu0 %1670
          %1674 = vset.pattern.permute.xlu0 0
          %1675 = vperm.xlu0 %1674, %v1111
          %v1676 = vpop.permute.xlu0 %1675
          %1679 = vset.pattern.permute.xlu0 0
          %1680 = vperm.xlu0 %1679, %v1112
          %v1681 = vpop.permute.xlu0 %1680
          %1684 = vset.pattern.permute.xlu0 0
          %1685 = vperm.xlu0 %1684, %v1113
          %v1686 = vpop.permute.xlu0 %1685
          %1689 = vset.pattern.permute.xlu0 0
          %1690 = vperm.xlu0 %1689, %v1114
          %v1691 = vpop.permute.xlu0 %1690
          %1694 = vset.pattern.permute.xlu0 0
          %1695 = vperm.xlu0 %1694, %v1115
          %v1696 = vpop.permute.xlu0 %1695
          %1699 = vset.pattern.permute.xlu0 0
          %1700 = vperm.xlu0 %1699, %v1116
          %v1701 = vpop.permute.xlu0 %1700
          %1704 = vset.pattern.permute.xlu0 0
          %1705 = vperm.xlu0 %1704, %v1117
          %v1706 = vpop.permute.xlu0 %1705
          %1709 = vset.pattern.permute.xlu0 0
          %1710 = vperm.xlu0 %1709, %v1118
          %v1711 = vpop.permute.xlu0 %1710
          %v1713 = vmul.f32 %v1636, %v1555
          %v1714 = vmul.f32 %v1641, %v1560
          %v1715 = vmul.f32 %v1646, %v1565
          %v1716 = vmul.f32 %v1651, %v1570
          %v1717 = vmul.f32 %v1656, %v1575
          %v1718 = vmul.f32 %v1661, %v1580
          %v1719 = vmul.f32 %v1666, %v1585
          %v1720 = vmul.f32 %v1671, %v1590
          %v1721 = vmul.f32 %v1676, %v1595
          %v1722 = vmul.f32 %v1681, %v1600
          %v1723 = vmul.f32 %v1686, %v1605
          %v1724 = vmul.f32 %v1691, %v1610
          %v1725 = vmul.f32 %v1696, %v1615
          %v1726 = vmul.f32 %v1701, %v1620
          %v1727 = vmul.f32 %v1706, %v1625
          %v1728 = vmul.f32 %v1711, %v1630
          %1729 = vst [vmem:[%s609] sm:$0xff] %v1713
          %1730 = vst [vmem:[%s609 + $0x8] sm:$0xff] %v1714
          %1731 = vst [vmem:[%s609 + $0x10] sm:$0xff] %v1715
          %1732 = vst [vmem:[%s609 + $0x18] sm:$0xff] %v1716
          %1733 = vst [vmem:[%s609 + $0x20] sm:$0xff] %v1717
          %1734 = vst [vmem:[%s609 + $0x28] sm:$0xff] %v1718
          %1735 = vst [vmem:[%s609 + $0x30] sm:$0xff] %v1719
          %1736 = vst [vmem:[%s609 + $0x38] sm:$0xff] %v1720
          %1737 = vst [vmem:[%s609 + $0x40] sm:$0xff] %v1721
          %1738 = vst [vmem:[%s609 + $0x48] sm:$0xff] %v1722
          %1739 = vst [vmem:[%s609 + $0x50] sm:$0xff] %v1723
          %1740 = vst [vmem:[%s609 + $0x58] sm:$0xff] %v1724
          %1741 = vst [vmem:[%s609 + $0x60] sm:$0xff] %v1725
          %1742 = vst [vmem:[%s609 + $0x68] sm:$0xff] %v1726
          %1743 = vst [vmem:[%s609 + $0x70] sm:$0xff] %v1727
          %1744 = vst [vmem:[%s609 + $0x78] sm:$0xff] %v1728
        $region84: #{tpu_custom_call.1} parent=47 // pred_fallthru
          _
        %s1745 = smul.u32 16, %s42
        %p1746 = scmp.lt.s32.totalorder %s1745, 31
        %s1747 = scalar_select %p1746, %s1745, 31
        %s1748 = smul.addr %s1747, 8
        %s1749 = scalar_lea.vmem %s7, %s1748
        %s1750 = smul.u32 16, %s42
        %p1751 = scmp.lt.s32.totalorder %s1750, 31
        %s1752 = scalar_select %p1751, %s1750, 31
        %s1753 = smul.addr %s1752, 8
        %s1754 = scalar_lea.vmem %s8, %s1753
        %s1755 = sand.u32 %s288, 1
        %s1756 = scalar_lea.sflag [#allocation6], %s1755
        %s1757 = sand.u32 %s288, 1
        %s1758 = smul.addr %s1757, 128
        %s1759 = scalar_lea.vmem [#allocation16], %s1758
        %s1760 = sand.u32 %s314, 1
        %s1761 = scalar_lea.sflag [#allocation18], %s1760
        %s1762 = sand.u32 %s314, 1
        %s1763 = smul.addr %s1762, 128
        %s1764 = scalar_lea.vmem [#allocation17], %s1763
        // Predicated region
        $region85: #{tpu_custom_call.1} parent=47 // pred_check
          %p1765 = pneg %p246
        $region86: #{tpu_custom_call.1} parent=47 // pred_check_branch
          %1767 = sbr.rel (%p1765) target = $region88
        $region87: #{tpu_custom_call.1} parent=47 // pred_region
          %s1768 = smul.u32 16, %s42
        $region88: #{tpu_custom_call.1} parent=47 // pred_fallthru
          _
        // Predicated region
        $region89: #{tpu_custom_call.1} parent=47 // pred_check
          %p1769 = pneg %p272
        $region90: #{tpu_custom_call.1} parent=47 // pred_check_branch
          %1771 = sbr.rel (%p1769) target = $region92
        $region91: #{tpu_custom_call.1} parent=47 // pred_region
          %s1772 = smul.u32 16, %s42
        $region92: #{tpu_custom_call.1} parent=47 // pred_fallthru
          _
        // Predicated region
        $region93: #{tpu_custom_call.1} parent=47 // pred_check
          %p1773 = pneg %p298
        $region94: #{tpu_custom_call.1} parent=47 // pred_check_branch
          %1775 = sbr.rel (%p1773) target = $region96
        $region95: #{tpu_custom_call.1} parent=47 // pred_region
          %s1776 = smul.u32 16, %s42
          %s1778 = ssub.s32 2048, 2048
          %1779 = vsyncadd %s1756, %s1778
          %s1780 = smul.addr %s1776, 128
          %s1781 = scalar_lea.hbm %s9, %s1780
          %s1782 = sshll.u32 %s1759, 4
          %s1783 = int_to_ptr.vmem [resolvable:$true] %s1782
          %1788 = dma.vmem_to_hbm [thread:$0]  %s1783, 2048, %s1781, %s1756, 128, 128, 8
        $region96: #{tpu_custom_call.1} parent=47 // pred_fallthru
          _
        // Predicated region
        $region97: #{tpu_custom_call.1} parent=47 // pred_check
          %p1789 = pneg %p324
        $region98: #{tpu_custom_call.1} parent=47 // pred_check_branch
          %1791 = sbr.rel (%p1789) target = $region100
        $region99: #{tpu_custom_call.1} parent=47 // pred_region
          %s1792 = smul.u32 16, %s42
          %s1794 = ssub.s32 2048, 2048
          %1795 = vsyncadd %s1761, %s1794
          %s1796 = smul.addr %s1792, 128
          %s1797 = scalar_lea.hbm %s10, %s1796
          %s1798 = sshll.u32 %s1764, 4
          %s1799 = int_to_ptr.vmem [resolvable:$true] %s1798
          %1804 = dma.vmem_to_hbm [thread:$0]  %s1799, 2048, %s1797, %s1761, 128, 128, 8
        $region100: #{tpu_custom_call.1} parent=47 // pred_fallthru
          _
      $region48: #{tpu_custom_call.1} parent=5 // pred_fallthru
        _
      %p1805 = scmp.le.s32.totalorder 2, %s33
      // Predicated region
      $region101: #{tpu_custom_call.1} parent=5 // pred_check
        %p1806 = pneg %p1805
      $region102: #{tpu_custom_call.1} parent=5 // pred_check_branch
        %1808 = sbr.rel (%p1806) target = $region104
      $region103: #{tpu_custom_call.1} parent=5 // pred_region
        %s1809 = ssub.s32 %s33, 2
        // Predicated region
        $region105: #{tpu_custom_call.1} parent=103 // pred_check
          %p1810 = pneg %p252
        $region106: #{tpu_custom_call.1} parent=103 // pred_check_branch
          %1812 = sbr.rel (%p1810) target = $region108
        $region107: #{tpu_custom_call.1} parent=103 // pred_region
          %s1813 = smul.u32 16, %s44
          %p1814 = scmp.lt.s32.totalorder %s1813, 31
          %s1815 = scalar_select %p1814, %s1813, 31
          %s1816 = smul.addr %s1815, 8
          %s1817 = scalar_lea.vmem %s7, %s1816
        $region108: #{tpu_custom_call.1} parent=103 // pred_fallthru
          _
        // Predicated region
        $region109: #{tpu_custom_call.1} parent=103 // pred_check
          %p1818 = pneg %p278
        $region110: #{tpu_custom_call.1} parent=103 // pred_check_branch
          %1820 = sbr.rel (%p1818) target = $region112
        $region111: #{tpu_custom_call.1} parent=103 // pred_region
          %s1821 = smul.u32 16, %s44
          %p1822 = scmp.lt.s32.totalorder %s1821, 31
          %s1823 = scalar_select %p1822, %s1821, 31
          %s1824 = smul.addr %s1823, 8
          %s1825 = scalar_lea.vmem %s8, %s1824
        $region112: #{tpu_custom_call.1} parent=103 // pred_fallthru
          _
        // Predicated region
        $region113: #{tpu_custom_call.1} parent=103 // pred_check
          %p1826 = pneg %p304
        $region114: #{tpu_custom_call.1} parent=103 // pred_check_branch
          %1828 = sbr.rel (%p1826) target = $region116
        $region115: #{tpu_custom_call.1} parent=103 // pred_region
          %s1829 = sand.u32 %s289, 1
          %s1830 = scalar_lea.sflag [#allocation6], %s1829
          %s1831 = sand.u32 %s289, 1
          %s1832 = smul.addr %s1831, 128
          %s1833 = scalar_lea.vmem [#allocation16], %s1832
          %1834 = dma.done %s1830, 2048
        $region116: #{tpu_custom_call.1} parent=103 // pred_fallthru
          _
        // Predicated region
        $region117: #{tpu_custom_call.1} parent=103 // pred_check
          %p1835 = pneg %p330
        $region118: #{tpu_custom_call.1} parent=103 // pred_check_branch
          %1837 = sbr.rel (%p1835) target = $region120
        $region119: #{tpu_custom_call.1} parent=103 // pred_region
          %s1838 = sand.u32 %s315, 1
          %s1839 = scalar_lea.sflag [#allocation18], %s1838
          %s1840 = sand.u32 %s315, 1
          %s1841 = smul.addr %s1840, 128
          %s1842 = scalar_lea.vmem [#allocation17], %s1841
          %1843 = dma.done %s1839, 2048
        $region120: #{tpu_custom_call.1} parent=103 // pred_fallthru
          _
      $region104: #{tpu_custom_call.1} parent=5 // pred_fallthru
        _
    $region6: #{tpu_custom_call.1} parent=1 // loop_footer
      %s37 = sadd.s32 1, %s33
    $region7: #{tpu_custom_call.1} parent=1 // loop_footer_branch
      %32 = sbr.rel target = $region3
    $region8: #{tpu_custom_call.1} parent=1 // loop_exit
      _
    %1844 = vsyncpa [#allocation5], 1
    %s1845 = scalar_lea.sflag [#allocation5], 1
    %1846 = vsyncpa %s1845, 1
    %1847 = vsyncpa [#allocation8], 1
    %s1848 = scalar_lea.sflag [#allocation8], 1
    %1849 = vsyncpa %s1848, 1
    %1850 = vsyncpa [#allocation11], 1
    %s1851 = scalar_lea.sflag [#allocation11], 1
    %1852 = vsyncpa %s1851, 1
    %1853 = vsyncpa [#allocation14], 1
    %1854 = vsyncpa [#allocation6], 1
    %s1855 = scalar_lea.sflag [#allocation6], 1
    %1856 = vsyncpa %s1855, 1
    %1857 = vsyncpa [#allocation18], 1
    %s1858 = scalar_lea.sflag [#allocation18], 1
    %1859 = vsyncpa %s1858, 1

</llo_original>
